<compile_context>
chip_gen: v6e
topology: v6e:2x2x1
jax: 0.10.0
libtpu: 0.0.40
codegen_flags: <defaults>
</compile_context>

<pallas_src>
import functools
from typing import NamedTuple

import jax
import jax.numpy as jnp
from jax.experimental import pallas as pl
from jax.experimental.pallas import tpu as pltpu

PAD_ID = 0          # SPECIAL_TOKENS.PAD in l1_dict
UNK_ID = 1          # SPECIAL_TOKENS.UNK in l1_dict
NEG_INF = -1e30     # finite stand-in for -inf; exp() underflows to exactly 0
OUT_LANES = 128     # lane-dense per-token loss output (written once per t-tile)


def _ceil_to(x, m):
    return -(-x // m) * m


def _cdiv(a, b):
    return -(-a // b)


def _tpu_generation():
    try:
        kind = jax.devices()[0].device_kind.lower()
    except Exception:
        return "unknown"
    if "v7" in kind or "7x" in kind:
        return "v7x"
    if "v6" in kind:
        return "v6e"
    if "v5" in kind:
        return "v5e"
    return "unknown"


# --------------------------------------------------------------------------- #
# Kernel
# --------------------------------------------------------------------------- #
def _cloze_ce_kernel(pad_id, tv, v1,
                     mixed_ref, wctx_ref, bctx_ref, tgtemb_ref, embt_ref,
                     amask_ref, tgt_ref,
                     loss_ref,
                     hid_ref, m_ref, l_ref, tl_ref):
    v = pl.program_id(1)
    nv = pl.num_programs(1)

    @pl.when(v == 0)
    def _init():
        # TODO(synk): ContextEncoder.forward is an empty stub in the reference
        # module; modeled here as a single tanh(Linear) layer (hidden == D).
        h = jnp.dot(mixed_ref[...], wctx_ref[...],
                    preferred_element_type=jnp.float32) + bctx_ref[...]
        hb = jnp.tanh(h).astype(jnp.bfloat16)
        hid_ref[...] = hb                         # reused across all v tiles
        m_ref[...] = jnp.full_like(m_ref, NEG_INF)
        l_ref[...] = jnp.zeros_like(l_ref)
        # Target logit, hoisted out of the vocab loop: dot(hid, emb[j_data])
        # computed once per token tile on the VPU (f32 accumulation).
        tl_ref[...] = jnp.sum(hb.astype(jnp.float32)
                              * tgtemb_ref[...].astype(jnp.float32),
                              axis=-1, keepdims=True)

    # Tied decoder over this vocab tile: [tt, Dp] x [Dp, tv] -> [tt, tv]
    # (MXU, bf16 in / f32 acc, table pre-transposed so no per-step transpose).
    logits = jnp.dot(hid_ref[...], embt_ref[...],
                     preferred_element_type=jnp.float32)

    def _update(lg):
        m_prev = m_ref[...]
        m_new = jnp.maximum(m_prev, jnp.max(lg, axis=-1, keepdims=True))
        alpha = jnp.exp(m_prev - m_new)
        l_ref[...] = alpha * l_ref[...] + jnp.sum(jnp.exp(lg - m_new),
                                                  axis=-1, keepdims=True)
        m_ref[...] = m_new

    # Tiles fully inside [0, V1) are never masked (addmask == 0 there), so the
    # per-logit mask add is skipped on them.  Invariant: tile 0 always holds at
    # least one unmasked L1 column (V1 >= 1), so m_ref becomes finite at v == 0
    # and fully-masked later tiles contribute exactly 0 to the denominator.
    needs_mask = (v + 1) * tv > v1

    @pl.when(needs_mask)
    def _masked():
        _update(logits + amask_ref[...])

    @pl.when(jnp.logical_not(needs_mask))
    def _unmasked():
        _update(logits)

    @pl.when(v == nv - 1)
    def _finalize():
        lse = m_ref[...] + jnp.log(l_ref[...])
        # targets at l2 positions are offset by +V1 so they can never alias
        # PAD_ID -> matches torch CrossEntropyLoss(ignore_index=PAD).
        valid = (tgt_ref[...] != pad_id).astype(jnp.float32)
        per_tok = (lse - tl_ref[...]) * valid                    # [tt, 1]
        loss_ref[...] = jnp.broadcast_to(per_tok, loss_ref.shape)


# --------------------------------------------------------------------------- #
# Parameter preparation (run once; persists the decoder table)
# --------------------------------------------------------------------------- #
class PreparedCloze(NamedTuple):
    l1_emb: jax.Array      # [V1, D]  f32 (input-embedding gathers)
    l2_emb: jax.Array      # [V2, D]  f32
    emb_t: jax.Array       # [Dp, Vp] bf16, transposed + padded decoder table
    w: jax.Array           # [Dp, Dp] bf16, context-encoder weight
    b: jax.Array           # [1, Dp]  f32,  context-encoder bias
    V1: int
    V2: int
    D: int
    Dp: int
    Vp: int
    tv: int
    nv: int
    tt_cap: int
    vmem_limit: int
    gen: str


def prepare_cloze_params(l1_emb, l2_emb, w_ctx, b_ctx, *, tv=None):
    """Concat / bf16-cast / pad / transpose the tied decoder table ONCE."""
    V1, D = l1_emb.shape
    V2 = l2_emb.shape[0]
    V = V1 + V2
    assert V1 >= 1, "tile 0 needs at least one unmasked L1 column"

    gen = _tpu_generation()
    if gen in ("v5e", "v6e"):
        # 128 MiB physical VMEM: big logits temporary, nt = 1 when it fits.
        tv_def, logits_budget, vmem_limit = 2048, 24 << 20, 80 << 20
    else:
        # v7x (64 MiB physical) or unknown: conservative sizing.
        tv_def, logits_budget, vmem_limit = 2048, 12 << 20, 48 << 20

    Dp = _ceil_to(D, 128)
    Vp128 = _ceil_to(V, 128)
    if tv is None:
        tv = min(tv_def, Vp128)
    tv = _ceil_to(min(tv, Vp128), 128)
    nv = _cdiv(Vp128, tv)
    Vp = nv * tv
    # tt cap so the two f32 [tt, tv] temporaries stay inside the logits budget.
    tt_cap = max(256, (logits_budget // (tv * 8)) // 256 * 256)

    emb = jnp.concatenate([l1_emb, l2_emb], axis=0).astype(jnp.bfloat16)
    emb = jnp.pad(emb, ((0, Vp - V), (0, Dp - D)))
    emb_t = jnp.transpose(emb)                                   # [Dp, Vp]
    w = jnp.pad(w_ctx, ((0, Dp - D), (0, Dp - D))).astype(jnp.bfloat16)
    b = jnp.pad(b_ctx, ((0, 0), (0, Dp - D))).astype(jnp.float32)

    return PreparedCloze(l1_emb=l1_emb, l2_emb=l2_emb, emb_t=emb_t, w=w, b=b,
                         V1=V1, V2=V2, D=D, Dp=Dp, Vp=Vp, tv=tv, nv=nv,
                         tt_cap=tt_cap, vmem_limit=vmem_limit, gen=gen)


# --------------------------------------------------------------------------- #
# Forward
# --------------------------------------------------------------------------- #
def l2_ce_cloze_forward(params: PreparedCloze, lengths, l1_data, l2_data, ind,
                        *, tt=None):
    """Replicates L2_CE_CLOZE.forward(batch) -> (loss, l2_mask)."""
    del lengths  # batch_size == 1, full-length sequence (no packing needed)
    assert l1_data.shape[0] == 1
    T = l1_data.shape[1]
    V1, V2, D = params.V1, params.V2, params.D
    Dp, Vp, tv, nv = params.Dp, params.Vp, params.tv, params.nv
    V = V1 + V2

    # --- glue: index logic / gathers (plain JAX, O(T*D + Vp)) ---------------
    l1_idxs = (ind == 1).astype(jnp.int32)
    l2_idxs = (ind == 2).astype(jnp.int32)
    special = (l1_data == PAD_ID) | (l1_data == UNK_ID)
    l1_idxs = jnp.where(special, 0, l1_idxs)
    l2_idxs = jnp.where(special, 0, l2_idxs)

    l1e = jnp.take(params.l1_emb, l1_data[0], axis=0)            # [T, D] f32
    l2e = jnp.take(params.l2_emb, l2_data[0], axis=0)            # [T, D] f32
    mixed = (l1_idxs[0, :, None].astype(jnp.float32) * l1e
             + l2_idxs[0, :, None].astype(jnp.float32) * l2e
             ).astype(jnp.bfloat16)                              # bf16 in wrapper

    # j_data: l1 token ids, except L2 positions get (l2 id + V1)
    j_data = jnp.where(l2_idxs[0] == 1, l2_data[0] + V1,
                       l1_data[0]).astype(jnp.int32)             # [T]
    # target embedding rows (== emb[j_data]); reuses the gathers above
    tgt_emb = jnp.where(l2_idxs[0, :, None] == 1, l2e, l1e).astype(jnp.bfloat16)

    # l2_mask: ones over l2 vocab, zero for exposed l2 words
    scatter_idx = jnp.where(l2_idxs[0] == 1, l2_data[0], V2)     # V2 == OOB dummy
    l2_mask = jnp.ones((V2,), jnp.int32).at[scatter_idx].set(0, mode='drop')

    # additive -inf mask over the concatenated+padded vocab
    addmask = jnp.concatenate([
        jnp.zeros((V1,), jnp.float32),
        l2_mask.astype(jnp.float32) * NEG_INF,
        jnp.full((Vp - V,), NEG_INF, jnp.float32)])[None, :]     # [1, Vp]

    # --- token tiling ---------------------------------------------------------
    Tp8 = _ceil_to(T, 8)
    if tt is None:
        if Tp8 <= 256:
            tt = Tp8
        else:
            # v7x: split across the 2 TensorCores when T is large enough;
            # v5e/v6e: single t-tile (stream the decoder table exactly once).
            nt_pref = 2 if (params.gen == "v7x" and Tp8 >= 1024) else 1
            tt = min(params.tt_cap, _ceil_to(_cdiv(Tp8, nt_pref), 256))
    tt = _ceil_to(max(8, min(tt, Tp8)), 8)
    nt = _cdiv(Tp8, tt)
    Tp = nt * tt

    mixed = jnp.pad(mixed, ((0, Tp - T), (0, Dp - D)))
    tgt_emb = jnp.pad(tgt_emb, ((0, Tp - T), (0, Dp - D)))
    tgt = jnp.pad(j_data, (0, Tp - T), constant_values=PAD_ID)[:, None]

    kernel = functools.partial(_cloze_ce_kernel, PAD_ID, tv, V1)
    cost = pl.CostEstimate(
        flops=int(2 * Tp * Dp * Dp + 2 * Tp * Dp * Vp + 2 * Tp * Dp),
        transcendentals=int(Tp * Vp + Tp * Dp + Tp),
        bytes_accessed=int(2 * Tp * Dp * 2 + Dp * Dp * 2 + Dp * 4
                           + nt * (Vp * Dp * 2 + Vp * 4)
                           + Tp * 4 + Tp * OUT_LANES * 4))

    per_tok = pl.pallas_call(
        kernel,
        grid_spec=pltpu.PrefetchScalarGridSpec(
            num_scalar_prefetch=0,
            grid=(nt, nv),
            in_specs=[
                pl.BlockSpec((tt, Dp), lambda t, v: (t, 0)),     # mixed (bf16)
                pl.BlockSpec((Dp, Dp), lambda t, v: (0, 0)),     # context W (bf16)
                pl.BlockSpec((1, Dp), lambda t, v: (0, 0)),      # context b (f32)
                pl.BlockSpec((tt, Dp), lambda t, v: (t, 0)),     # target emb (bf16)
                # decoder tile, pre-transposed [Dp, tv] (bf16).
                # TODO(synk): on v5e, if the decoder-tile DMA shows exposed
                # waits in the trace, add pipeline_mode=pl.Buffered(3) here.
                pl.BlockSpec((Dp, tv), lambda t, v: (0, v)),
                pl.BlockSpec((1, tv), lambda t, v: (0, v)),      # additive mask
                pl.BlockSpec((tt, 1), lambda t, v: (t, 0)),      # targets (j_data)
            ],
            out_specs=pl.BlockSpec((tt, OUT_LANES), lambda t, v: (t, 0)),
            scratch_shapes=[
                pltpu.VMEM((tt, Dp), jnp.bfloat16),   # hidden (reused over v)
                pltpu.VMEM((tt, 1), jnp.float32),     # running max
                pltpu.VMEM((tt, 1), jnp.float32),     # running sum-exp
                pltpu.VMEM((tt, 1), jnp.float32),     # target logit
            ]),
        out_shape=jax.ShapeDtypeStruct((Tp, OUT_LANES), jnp.float32),
        compiler_params=pltpu.CompilerParams(
            dimension_semantics=("parallel", "arbitrary"),
            vmem_limit_bytes=params.vmem_limit),
        cost_estimate=cost,
    )(mixed, params.w, params.b, tgt_emb, params.emb_t, addmask, tgt)

    # padded rows have tgt == PAD -> valid == 0 -> contribute exactly 0
    loss = jnp.sum(per_tok[:, 0])
    return loss, l2_mask


# --------------------------------------------------------------------------- #
# Pure-jnp reference (identical bf16 MXU casting) for the correctness check
# --------------------------------------------------------------------------- #
def _reference_forward(lengths, l1_data, l2_data, ind, l1_emb, l2_emb,
                       w_ctx, b_ctx):
    del lengths
    V1, _ = l1_emb.shape
    V2 = l2_emb.shape[0]
    l1_idxs = (ind == 1).astype(jnp.int32)
    l2_idxs = (ind == 2).astype(jnp.int32)
    special = (l1_data == PAD_ID) | (l1_data == UNK_ID)
    l1_idxs = jnp.where(special, 0, l1_idxs)
    l2_idxs = jnp.where(special, 0, l2_idxs)
    l1e = jnp.take(l1_emb, l1_data[0], axis=0)
    l2e = jnp.take(l2_emb, l2_data[0], axis=0)
    mixed = (l1_idxs[0, :, None].astype(jnp.float32) * l1e
             + l2_idxs[0, :, None].astype(jnp.float32) * l2e)
    hidden = jnp.tanh(jnp.dot(mixed.astype(jnp.bfloat16),
                              w_ctx.astype(jnp.bfloat16),
                              preferred_element_type=jnp.float32) + b_ctx)
    emb = jnp.concatenate([l1_emb, l2_emb], 0).astype(jnp.bfloat16)
    logits = jax.lax.dot_general(hidden.astype(jnp.bfloat16), emb,
                                 (((1,), (1,)), ((), ())),
                                 preferred_element_type=jnp.float32)
    scatter_idx = jnp.where(l2_idxs[0] == 1, l2_data[0], V2)
    l2_mask = jnp.ones((V2,), jnp.int32).at[scatter_idx].set(0, mode='drop')
    addmask = jnp.concatenate([jnp.zeros((V1,), jnp.float32),
                               l2_mask.astype(jnp.float32) * NEG_INF])
    logits = logits + addmask[None, :]
    j_data = jnp.where(l2_idxs[0] == 1, l2_data[0] + V1, l1_data[0])
    logp = jax.nn.log_softmax(logits, axis=-1)
    nll = -jnp.take_along_axis(logp, j_data[:, None], axis=1)[:, 0]
    valid = (j_data != PAD_ID).astype(jnp.float32)
    return jnp.sum(nll * valid), l2_mask


if __name__ == "__main__":
    key = jax.random.PRNGKey(0)
    B, T, D = 1, 48, 128      # batch must be 1 (module asserts it); D aligned to 128
    V1, V2 = 512, 512

    k1, k2, k3, k4, k5, k6, k7 = jax.random.split(key, 7)
    l1_emb = 0.1 * jax.random.normal(k1, (V1, D), jnp.float32)
    l2_emb = 0.1 * jax.random.normal(k2, (V2, D), jnp.float32)
    w_ctx = 0.1 * jax.random.normal(k3, (D, D), jnp.float32)
    b_ctx = 0.1 * jax.random.normal(k4, (1, D), jnp.float32)

    l1_data = jax.random.randint(k5, (B, T), 2, V1, jnp.int32)
    l2_data = jax.random.randint(k6, (B, T), 0, V2, jnp.int32)
    ind = jax.random.randint(k7, (B, T), 0, 3, jnp.int32)      # 0 / 1 / 2
    # exercise ignore_index (PAD tail) and the special-token zeroing (UNK head)
    l1_data = l1_data.at[0, -3:].set(PAD_ID)
    l1_data = l1_data.at[0, 0].set(UNK_ID)
    lengths = jnp.array([T], jnp.int32)

    # decoder table / encoder weights prepared once, reused across calls
    params = prepare_cloze_params(l1_emb, l2_emb, w_ctx, b_ctx)
    loss_auto, mask_auto = l2_ce_cloze_forward(params, lengths, l1_data,
                                               l2_data, ind)

    # small-tile run: exercises the multi-tile online softmax, the mask gating
    # (two L1-only vocab tiles + two masked L2 tiles) and multiple t-tiles.
    params_small = prepare_cloze_params(l1_emb, l2_emb, w_ctx, b_ctx, tv=256)
    loss_tiled, mask_tiled = l2_ce_cloze_forward(params_small, lengths, l1_data,
                                                 l2_data, ind, tt=16)
    jax.block_until_ready((loss_auto, loss_tiled))

    ref_loss, ref_mask = _reference_forward(lengths, l1_data, l2_data, ind,
                                            l1_emb, l2_emb, w_ctx, b_ctx)
    assert jnp.allclose(loss_auto, ref_loss, rtol=2e-2, atol=2e-2), (loss_auto, ref_loss)
    assert jnp.allclose(loss_tiled, ref_loss, rtol=2e-2, atol=2e-2), (loss_tiled, ref_loss)
    assert bool(jnp.all(mask_auto == ref_mask))
    assert bool(jnp.all(mask_tiled == ref_mask))
    print("KERNEL_OK")
</pallas_src>

<mosaic_0001>
module attributes {stable_mosaic.version = 11 : i64} {
  func.func @_cloze_ce_kernel(%arg0: i32, %arg1: i32, %arg2: memref<48x128xbf16, #tpu.memory_space<vmem>>, %arg3: memref<128x128xbf16, #tpu.memory_space<vmem>>, %arg4: memref<1x128xf32, #tpu.memory_space<vmem>>, %arg5: memref<48x128xbf16, #tpu.memory_space<vmem>>, %arg6: memref<128x1024xbf16, #tpu.memory_space<vmem>>, %arg7: memref<1x1024xf32, #tpu.memory_space<vmem>>, %arg8: memref<48x1xi32, #tpu.memory_space<vmem>>, %arg9: memref<48x128xf32, #tpu.memory_space<vmem>>, %arg10: memref<48x128xbf16, #tpu.memory_space<vmem>>, %arg11: memref<48x1xf32, #tpu.memory_space<vmem>>, %arg12: memref<48x1xf32, #tpu.memory_space<vmem>>, %arg13: memref<48x1xf32, #tpu.memory_space<vmem>>) attributes {dimension_semantics = [#tpu.dimension_semantics<parallel>, #tpu.dimension_semantics<arbitrary>], iteration_bounds = array<i64: 1, 1>, scalar_prefetch = 0 : i64, scratch_operands = 4 : i64, tpu.core_type = #tpu.core_type<tc>, window_params = [{transform_indices = @transform_0, window_bounds = array<i64: 48, 128>}, {pipeline_mode = #tpu.pipeline_mode<synchronous>, transform_indices = @transform_1, window_bounds = array<i64: 128, 128>}, {pipeline_mode = #tpu.pipeline_mode<synchronous>, transform_indices = @transform_2, window_bounds = array<i64: 1, 128>}, {transform_indices = @transform_3, window_bounds = array<i64: 48, 128>}, {transform_indices = @transform_4, window_bounds = array<i64: 128, 1024>}, {transform_indices = @transform_5, window_bounds = array<i64: 1, 1024>}, {transform_indices = @transform_6, window_bounds = array<i64: 48, 1>}, {transform_indices = @transform_7, window_bounds = array<i64: 48, 128>}]} {
    %c0_i32 = arith.constant 0 : i32
    %0 = arith.cmpi eq, %arg1, %c0_i32 : i32
    %1 = arith.extui %0 : i1 to i32
    %c0_i32_0 = arith.constant 0 : i32
    %2 = arith.cmpi ne, %1, %c0_i32_0 : i32
    scf.if %2 {
      %c0_8 = arith.constant 0 : index
      %c0_9 = arith.constant 0 : index
      %17 = vector.load %arg2[%c0_8, %c0_9] : memref<48x128xbf16, #tpu.memory_space<vmem>>, vector<48x128xbf16>
      %c0_10 = arith.constant 0 : index
      %c0_11 = arith.constant 0 : index
      %18 = vector.load %arg3[%c0_10, %c0_11] : memref<128x128xbf16, #tpu.memory_space<vmem>>, vector<128x128xbf16>
      %cst_12 = arith.constant dense<0.000000e+00> : vector<48x128xf32>
      %19 = tpu.matmul %17, %18, %cst_12 {dimension_numbers = #tpu.dot_dimension_numbers<[1], [0], [0], [1], [0, 0, 1, 1], [], []>} : vector<48x128xbf16>, vector<128x128xbf16>, vector<48x128xf32> -> vector<48x128xf32>
      %c0_13 = arith.constant 0 : index
      %c0_14 = arith.constant 0 : index
      %20 = vector.load %arg4[%c0_13, %c0_14] : memref<1x128xf32, #tpu.memory_space<vmem>>, vector<1x128xf32>
      %21 = vector.broadcast %20 : vector<1x128xf32> to vector<48x128xf32>
      %22 = arith.addf %19, %21 : vector<48x128xf32>
      %23 = math.tanh %22 : vector<48x128xf32>
      %24 = arith.truncf %23 : vector<48x128xf32> to vector<48x128xbf16>
      %c0_15 = arith.constant 0 : index
      %c0_16 = arith.constant 0 : index
      %25 = vector.load %arg10[%c0_15, %c0_16] : memref<48x128xbf16, #tpu.memory_space<vmem>>, vector<48x128xbf16>
      tpu.vector_store %arg10[%c0_15, %c0_16], %24 {strides = array<i32>} : memref<48x128xbf16, #tpu.memory_space<vmem>>, vector<48x128xbf16>,
      %cst_17 = arith.constant -1.000000e+30 : f32
      %26 = vector.broadcast %cst_17 : f32 to vector<48x1xf32>
      %c0_18 = arith.constant 0 : index
      %c0_19 = arith.constant 0 : index
      %27 = vector.load %arg11[%c0_18, %c0_19] : memref<48x1xf32, #tpu.memory_space<vmem>>, vector<48x1xf32>
      tpu.vector_store %arg11[%c0_18, %c0_19], %26 {strides = array<i32>} : memref<48x1xf32, #tpu.memory_space<vmem>>, vector<48x1xf32>,
      %cst_20 = arith.constant 0.000000e+00 : f32
      %28 = vector.broadcast %cst_20 : f32 to vector<48x1xf32>
      %c0_21 = arith.constant 0 : index
      %c0_22 = arith.constant 0 : index
      %29 = vector.load %arg12[%c0_21, %c0_22] : memref<48x1xf32, #tpu.memory_space<vmem>>, vector<48x1xf32>
      tpu.vector_store %arg12[%c0_21, %c0_22], %28 {strides = array<i32>} : memref<48x1xf32, #tpu.memory_space<vmem>>, vector<48x1xf32>,
      %30 = arith.extf %24 : vector<48x128xbf16> to vector<48x128xf32>
      %c0_23 = arith.constant 0 : index
      %c0_24 = arith.constant 0 : index
      %31 = vector.load %arg5[%c0_23, %c0_24] : memref<48x128xbf16, #tpu.memory_space<vmem>>, vector<48x128xbf16>
      %32 = arith.extf %31 : vector<48x128xbf16> to vector<48x128xf32>
      %33 = arith.mulf %30, %32 : vector<48x128xf32>
      %cst_25 = arith.constant dense<0.000000e+00> : vector<48xf32>
      %34 = vector.multi_reduction <add>, %33, %cst_25 [1] : vector<48x128xf32> to vector<48xf32>
      %35 = vector.shape_cast %34 : vector<48xf32> to vector<48x1xf32>
      %c0_26 = arith.constant 0 : index
      %c0_27 = arith.constant 0 : index
      %36 = vector.load %arg13[%c0_26, %c0_27] : memref<48x1xf32, #tpu.memory_space<vmem>>, vector<48x1xf32>
      tpu.vector_store %arg13[%c0_26, %c0_27], %35 {strides = array<i32>} : memref<48x1xf32, #tpu.memory_space<vmem>>, vector<48x1xf32>,
    } else {
    }
    %c0 = arith.constant 0 : index
    %c0_1 = arith.constant 0 : index
    %3 = vector.load %arg10[%c0, %c0_1] : memref<48x128xbf16, #tpu.memory_space<vmem>>, vector<48x128xbf16>
    %c0_2 = arith.constant 0 : index
    %c0_3 = arith.constant 0 : index
    %4 = vector.load %arg6[%c0_2, %c0_3] : memref<128x1024xbf16, #tpu.memory_space<vmem>>, vector<128x1024xbf16>
    %cst = arith.constant dense<0.000000e+00> : vector<48x1024xf32>
    %5 = tpu.matmul %3, %4, %cst {dimension_numbers = #tpu.dot_dimension_numbers<[1], [0], [0], [1], [0, 0, 1, 1], [], []>} : vector<48x128xbf16>, vector<128x1024xbf16>, vector<48x1024xf32> -> vector<48x1024xf32>
    %c1_i32 = arith.constant 1 : i32
    %6 = arith.addi %arg1, %c1_i32 : i32
    %c1024_i32 = arith.constant 1024 : i32
    %7 = arith.muli %6, %c1024_i32 : i32
    %c512_i32 = arith.constant 512 : i32
    %8 = arith.cmpi sgt, %7, %c512_i32 : i32
    %9 = arith.extui %8 : i1 to i32
    %c0_i32_4 = arith.constant 0 : i32
    %10 = arith.cmpi ne, %9, %c0_i32_4 : i32
    scf.if %10 {
      %c0_8 = arith.constant 0 : index
      %c0_9 = arith.constant 0 : index
      %17 = vector.load %arg7[%c0_8, %c0_9] : memref<1x1024xf32, #tpu.memory_space<vmem>>, vector<1x1024xf32>
      %18 = vector.broadcast %17 : vector<1x1024xf32> to vector<48x1024xf32>
      %19 = arith.addf %5, %18 : vector<48x1024xf32>
      %c0_10 = arith.constant 0 : index
      %c0_11 = arith.constant 0 : index
      %20 = vector.load %arg11[%c0_10, %c0_11] : memref<48x1xf32, #tpu.memory_space<vmem>>, vector<48x1xf32>
      %cst_12 = arith.constant dense<0xFF800000> : vector<48xf32>
      %21 = vector.multi_reduction <maximumf>, %19, %cst_12 [1] : vector<48x1024xf32> to vector<48xf32>
      %22 = vector.shape_cast %21 : vector<48xf32> to vector<48x1xf32>
      %23 = arith.maximumf %20, %22 : vector<48x1xf32>
      %24 = arith.subf %20, %23 : vector<48x1xf32>
      %25 = math.exp %24 : vector<48x1xf32>
      %c0_13 = arith.constant 0 : index
      %c0_14 = arith.constant 0 : index
      %26 = vector.load %arg12[%c0_13, %c0_14] : memref<48x1xf32, #tpu.memory_space<vmem>>, vector<48x1xf32>
      %27 = arith.mulf %25, %26 : vector<48x1xf32>
      %28 = vector.broadcast %23 : vector<48x1xf32> to vector<48x1024xf32>
      %29 = arith.subf %19, %28 : vector<48x1024xf32>
      %30 = math.exp %29 : vector<48x1024xf32>
      %cst_15 = arith.constant dense<0.000000e+00> : vector<48xf32>
      %31 = vector.multi_reduction <add>, %30, %cst_15 [1] : vector<48x1024xf32> to vector<48xf32>
      %32 = vector.shape_cast %31 : vector<48xf32> to vector<48x1xf32>
      %33 = arith.addf %27, %32 : vector<48x1xf32>
      %c0_16 = arith.constant 0 : index
      %c0_17 = arith.constant 0 : index
      %34 = vector.load %arg12[%c0_16, %c0_17] : memref<48x1xf32, #tpu.memory_space<vmem>>, vector<48x1xf32>
      tpu.vector_store %arg12[%c0_16, %c0_17], %33 {strides = array<i32>} : memref<48x1xf32, #tpu.memory_space<vmem>>, vector<48x1xf32>,
      %c0_18 = arith.constant 0 : index
      %c0_19 = arith.constant 0 : index
      %35 = vector.load %arg11[%c0_18, %c0_19] : memref<48x1xf32, #tpu.memory_space<vmem>>, vector<48x1xf32>
      tpu.vector_store %arg11[%c0_18, %c0_19], %23 {strides = array<i32>} : memref<48x1xf32, #tpu.memory_space<vmem>>, vector<48x1xf32>,
    } else {
    }
    %true = arith.constant true
    %11 = arith.xori %8, %true : i1
    %12 = arith.extui %11 : i1 to i32
    %c0_i32_5 = arith.constant 0 : i32
    %13 = arith.cmpi ne, %12, %c0_i32_5 : i32
    scf.if %13 {
      %c0_8 = arith.constant 0 : index
      %c0_9 = arith.constant 0 : index
      %17 = vector.load %arg11[%c0_8, %c0_9] : memref<48x1xf32, #tpu.memory_space<vmem>>, vector<48x1xf32>
      %cst_10 = arith.constant dense<0xFF800000> : vector<48xf32>
      %18 = vector.multi_reduction <maximumf>, %5, %cst_10 [1] : vector<48x1024xf32> to vector<48xf32>
      %19 = vector.shape_cast %18 : vector<48xf32> to vector<48x1xf32>
      %20 = arith.maximumf %17, %19 : vector<48x1xf32>
      %21 = arith.subf %17, %20 : vector<48x1xf32>
      %22 = math.exp %21 : vector<48x1xf32>
      %c0_11 = arith.constant 0 : index
      %c0_12 = arith.constant 0 : index
      %23 = vector.load %arg12[%c0_11, %c0_12] : memref<48x1xf32, #tpu.memory_space<vmem>>, vector<48x1xf32>
      %24 = arith.mulf %22, %23 : vector<48x1xf32>
      %25 = vector.broadcast %20 : vector<48x1xf32> to vector<48x1024xf32>
      %26 = arith.subf %5, %25 : vector<48x1024xf32>
      %27 = math.exp %26 : vector<48x1024xf32>
      %cst_13 = arith.constant dense<0.000000e+00> : vector<48xf32>
      %28 = vector.multi_reduction <add>, %27, %cst_13 [1] : vector<48x1024xf32> to vector<48xf32>
      %29 = vector.shape_cast %28 : vector<48xf32> to vector<48x1xf32>
      %30 = arith.addf %24, %29 : vector<48x1xf32>
      %c0_14 = arith.constant 0 : index
      %c0_15 = arith.constant 0 : index
      %31 = vector.load %arg12[%c0_14, %c0_15] : memref<48x1xf32, #tpu.memory_space<vmem>>, vector<48x1xf32>
      tpu.vector_store %arg12[%c0_14, %c0_15], %30 {strides = array<i32>} : memref<48x1xf32, #tpu.memory_space<vmem>>, vector<48x1xf32>,
      %c0_16 = arith.constant 0 : index
      %c0_17 = arith.constant 0 : index
      %32 = vector.load %arg11[%c0_16, %c0_17] : memref<48x1xf32, #tpu.memory_space<vmem>>, vector<48x1xf32>
      tpu.vector_store %arg11[%c0_16, %c0_17], %20 {strides = array<i32>} : memref<48x1xf32, #tpu.memory_space<vmem>>, vector<48x1xf32>,
    } else {
    }
    %c0_i32_6 = arith.constant 0 : i32
    %14 = arith.cmpi eq, %arg1, %c0_i32_6 : i32
    %15 = arith.extui %14 : i1 to i32
    %c0_i32_7 = arith.constant 0 : i32
    %16 = arith.cmpi ne, %15, %c0_i32_7 : i32
    scf.if %16 {
      %c0_8 = arith.constant 0 : index
      %c0_9 = arith.constant 0 : index
      %17 = vector.load %arg11[%c0_8, %c0_9] : memref<48x1xf32, #tpu.memory_space<vmem>>, vector<48x1xf32>
      %c0_10 = arith.constant 0 : index
      %c0_11 = arith.constant 0 : index
      %18 = vector.load %arg12[%c0_10, %c0_11] : memref<48x1xf32, #tpu.memory_space<vmem>>, vector<48x1xf32>
      %19 = math.log %18 : vector<48x1xf32>
      %20 = arith.addf %17, %19 : vector<48x1xf32>
      %c0_12 = arith.constant 0 : index
      %c0_13 = arith.constant 0 : index
      %21 = vector.load %arg8[%c0_12, %c0_13] : memref<48x1xi32, #tpu.memory_space<vmem>>, vector<48x1xi32>
      %c0_i32_14 = arith.constant 0 : i32
      %22 = vector.broadcast %c0_i32_14 : i32 to vector<48x1xi32>
      %23 = arith.cmpi ne, %21, %22 : vector<48x1xi32>
      %24 = arith.extui %23 : vector<48x1xi1> to vector<48x1xi32>
      %25 = arith.sitofp %24 : vector<48x1xi32> to vector<48x1xf32>
      %c0_15 = arith.constant 0 : index
      %c0_16 = arith.constant 0 : index
      %26 = vector.load %arg13[%c0_15, %c0_16] : memref<48x1xf32, #tpu.memory_space<vmem>>, vector<48x1xf32>
      %27 = arith.subf %20, %26 : vector<48x1xf32>
      %28 = arith.mulf %27, %25 : vector<48x1xf32>
      %29 = vector.shape_cast %28 : vector<48x1xf32> to vector<48x1xf32>
      %30 = vector.broadcast %29 : vector<48x1xf32> to vector<48x128xf32>
      %c0_17 = arith.constant 0 : index
      %c0_18 = arith.constant 0 : index
      %31 = vector.load %arg9[%c0_17, %c0_18] : memref<48x128xf32, #tpu.memory_space<vmem>>, vector<48x128xf32>
      tpu.vector_store %arg9[%c0_17, %c0_18], %30 {strides = array<i32>} : memref<48x128xf32, #tpu.memory_space<vmem>>, vector<48x128xf32>,
    } else {
    }
    return
  }
  func.func @transform_0(%arg0: i32, %arg1: i32) -> (i32, i32) {
    %c0_i32 = arith.constant 0 : i32
    %c0_i32_0 = arith.constant 0 : i32
    return %arg0, %c0_i32 : i32, i32
  }
  func.func @transform_1(%arg0: i32, %arg1: i32) -> (i32, i32) {
    %c0_i32 = arith.constant 0 : i32
    %c0_i32_0 = arith.constant 0 : i32
    %c0_i32_1 = arith.constant 0 : i32
    return %c0_i32, %c0_i32_0 : i32, i32
  }
  func.func @transform_2(%arg0: i32, %arg1: i32) -> (i32, i32) {
    %c0_i32 = arith.constant 0 : i32
    %c0_i32_0 = arith.constant 0 : i32
    %c0_i32_1 = arith.constant 0 : i32
    return %c0_i32, %c0_i32_0 : i32, i32
  }
  func.func @transform_3(%arg0: i32, %arg1: i32) -> (i32, i32) {
    %c0_i32 = arith.constant 0 : i32
    %c0_i32_0 = arith.constant 0 : i32
    return %arg0, %c0_i32 : i32, i32
  }
  func.func @transform_4(%arg0: i32, %arg1: i32) -> (i32, i32) {
    %c0_i32 = arith.constant 0 : i32
    %c0_i32_0 = arith.constant 0 : i32
    return %c0_i32, %arg1 : i32, i32
  }
  func.func @transform_5(%arg0: i32, %arg1: i32) -> (i32, i32) {
    %c0_i32 = arith.constant 0 : i32
    %c0_i32_0 = arith.constant 0 : i32
    return %c0_i32, %arg1 : i32, i32
  }
  func.func @transform_6(%arg0: i32, %arg1: i32) -> (i32, i32) {
    %c0_i32 = arith.constant 0 : i32
    %c0_i32_0 = arith.constant 0 : i32
    return %arg0, %c0_i32 : i32, i32
  }
  func.func @transform_7(%arg0: i32, %arg1: i32) -> (i32, i32) {
    %c0_i32 = arith.constant 0 : i32
    %c0_i32_0 = arith.constant 0 : i32
    return %arg0, %c0_i32 : i32, i32
  }
}

</mosaic_0001>

<llo_original>
// kernel: tpu_custom_call.1
$region0: #{tpu_custom_call.1}
  #allocation0 [shape = 'u32[]', space=smem, size = 0x4, offset = 0x4, fixed_abs, tag = 'smem constant byte address 0x4 - core index']
  #allocation1 [shape = 'u32[144,128]{1,0:T(1,128)}', space=vmem, size = 0x12000, scoped, tag = 'internal scratch']
  #allocation2 [shape = 'bf16[48,128]{1,0:T(8,128)(2,1)}', space=vmem, size = 0x3000, scoped, tag = 'scratch operand']
  #allocation3 [shape = 'f32[48,1]{1,0:T(8,128)}', space=vmem, size = 0x6000, scoped, tag = 'scratch operand']
  #allocation4 [shape = 'f32[48,1]{1,0:T(8,128)}', space=vmem, size = 0x6000, scoped, tag = 'scratch operand']
  #allocation5 [shape = 'f32[48,1]{1,0:T(8,128)}', space=vmem, size = 0x6000, scoped, tag = 'scratch operand']
  %s0 = inlined_call_operand.vmem [shape: bf16[48,128], index: 0, kind: input, shape index: {}]
  %s1 = inlined_call_operand.hbm [shape: bf16[128,128], index: 1, kind: input, shape index: {}]
  %s2 = inlined_call_operand.hbm [shape: f32[1,128], index: 2, kind: input, shape index: {}]
  %s3 = inlined_call_operand.vmem [shape: bf16[48,128], index: 3, kind: input, shape index: {}]
  %s4 = inlined_call_operand.hbm [shape: bf16[128,1024], index: 4, kind: input, shape index: {}]
  %s5 = inlined_call_operand.vmem [shape: f32[1,1024], index: 5, kind: input, shape index: {}]
  %s6 = inlined_call_operand.vmem [shape: s32[48,1], index: 6, kind: input, shape index: {}]
  %s7 = inlined_call_operand.hbm [shape: f32[48,128], index: 7, kind: output, shape index: {}]
  %s8 = sld [smem:[#allocation0]]
  $region66: #{tpu_custom_call.1} parent=0
    _
  %s10 = ssub.s32 1, %s8
  %s11 = scalar_select 0, %s10, %s8
  $region1: #{tpu_custom_call.1} parent=0
    #allocation6 [shape = 'u8[32768]{0}', space=vmem, size = 0x8000, scoped, tag = 'input window, operand 1, single buffered']
    #allocation7 [shape = 's32[1]{0}', space=sflag, size = 0x4, scoped, tag = 'scoped memory for tpu_custom_call.1']
    #allocation8 [shape = 's32[1]{0}', space=sflag, size = 0x4, scoped, tag = 'scoped memory for tpu_custom_call.1']
    #allocation9 [shape = 'u8[512]{0}', space=vmem, size = 0x400, scoped, tag = 'input window, operand 2, single buffered']
    #allocation10 [shape = 's32[1]{0}', space=sflag, size = 0x4, scoped, tag = 'scoped memory for tpu_custom_call.1']
    #allocation11 [shape = 'u8[262144]{0}', space=vmem, size = 0x40000, scoped, tag = 'input window, operand 4, single buffered']
    #allocation12 [shape = 'u8[24576]{0}', space=vmem, size = 0x6000, scoped, tag = 'output window, operand 0, single buffered']
    %12 = vsyncpa [#allocation7], 0
    %13 = vsyncpa [#allocation10], 0
    %14 = vsyncpa [#allocation8], 0
    // Predicated region
    $region2: #{tpu_custom_call.1} parent=1 // pred_check
      _
    $region3: #{tpu_custom_call.1} parent=1 // pred_check_branch
      %16 = sbr.rel (0) target = $region5
    $region4: #{tpu_custom_call.1} parent=1 // pred_region
      _
    $region5: #{tpu_custom_call.1} parent=1 // pred_fallthru
      _
    // Predicated region
    $region6: #{tpu_custom_call.1} parent=1 // pred_check
      _
    $region7: #{tpu_custom_call.1} parent=1 // pred_check_branch
      %18 = sbr.rel (0) target = $region9
    $region8: #{tpu_custom_call.1} parent=1 // pred_region
      %s20 = ssub.s32 1024, 1024
      %21 = vsyncadd [#allocation7], %s20
      %s22 = sshll.u32 [#allocation6], 4
      %s23 = int_to_ptr.vmem [resolvable:$true] %s22
      %28 = dma.hbm_to_vmem [thread:$0]  %s1, 1024, %s23, [#allocation7], 64, 64, 4
    $region9: #{tpu_custom_call.1} parent=1 // pred_fallthru
      _
    // Predicated region
    $region10: #{tpu_custom_call.1} parent=1 // pred_check
      _
    $region11: #{tpu_custom_call.1} parent=1 // pred_check_branch
      %30 = sbr.rel (0) target = $region13
    $region12: #{tpu_custom_call.1} parent=1 // pred_region
      %s32 = ssub.s32 16, 16
      %33 = vsyncadd [#allocation10], %s32
      %s35 = sshll.u32 [#allocation9], 4
      %s36 = int_to_ptr.vmem [resolvable:$true] %s35
      %38 = dma.hbm_to_vmem [thread:$0]  %s2, 16, %s36, [#allocation10]
    $region13: #{tpu_custom_call.1} parent=1 // pred_fallthru
      _
    // Predicated region
    $region14: #{tpu_custom_call.1} parent=1 // pred_check
      _
    $region15: #{tpu_custom_call.1} parent=1 // pred_check_branch
      %40 = sbr.rel (0) target = $region17
    $region16: #{tpu_custom_call.1} parent=1 // pred_region
      _
    $region17: #{tpu_custom_call.1} parent=1 // pred_fallthru
      _
    // Predicated region
    $region18: #{tpu_custom_call.1} parent=1 // pred_check
      _
    $region19: #{tpu_custom_call.1} parent=1 // pred_check_branch
      %42 = sbr.rel (0) target = $region21
    $region20: #{tpu_custom_call.1} parent=1 // pred_region
      %s44 = ssub.s32 8192, 8192
      %45 = vsyncadd [#allocation10], %s44
      %s46 = sshll.u32 [#allocation11], 4
      %s47 = int_to_ptr.vmem [resolvable:$true] %s46
      %52 = dma.hbm_to_vmem [thread:$0]  %s4, 8192, %s47, [#allocation10], 512, 512, 32
    $region21: #{tpu_custom_call.1} parent=1 // pred_fallthru
      _
    // Predicated region
    $region22: #{tpu_custom_call.1} parent=1 // pred_check
      _
    $region23: #{tpu_custom_call.1} parent=1 // pred_check_branch
      %54 = sbr.rel (0) target = $region25
    $region24: #{tpu_custom_call.1} parent=1 // pred_region
      _
    $region25: #{tpu_custom_call.1} parent=1 // pred_fallthru
      _
    // Predicated region
    $region26: #{tpu_custom_call.1} parent=1 // pred_check
      _
    $region27: #{tpu_custom_call.1} parent=1 // pred_check_branch
      %56 = sbr.rel (0) target = $region29
    $region28: #{tpu_custom_call.1} parent=1 // pred_region
      _
    $region29: #{tpu_custom_call.1} parent=1 // pred_fallthru
      _
    // Predicated region
    $region30: #{tpu_custom_call.1} parent=1 // pred_check
      _
    $region31: #{tpu_custom_call.1} parent=1 // pred_check_branch
      %58 = sbr.rel (0) target = $region33
    $region32: #{tpu_custom_call.1} parent=1 // pred_region
      %59 = dma.done [#allocation7], 1024
    $region33: #{tpu_custom_call.1} parent=1 // pred_fallthru
      _
    // Predicated region
    $region34: #{tpu_custom_call.1} parent=1 // pred_check
      _
    $region35: #{tpu_custom_call.1} parent=1 // pred_check_branch
      %61 = sbr.rel (0) target = $region37
    $region36: #{tpu_custom_call.1} parent=1 // pred_region
      %62 = dma.done [#allocation10], 16
    $region37: #{tpu_custom_call.1} parent=1 // pred_fallthru
      _
    // Predicated region
    $region38: #{tpu_custom_call.1} parent=1 // pred_check
      _
    $region39: #{tpu_custom_call.1} parent=1 // pred_check_branch
      %64 = sbr.rel (0) target = $region41
    $region40: #{tpu_custom_call.1} parent=1 // pred_region
      %65 = dma.done [#allocation10], 8192
    $region41: #{tpu_custom_call.1} parent=1 // pred_fallthru
      _
    %p67 = scmp.eq.s32.totalorder 0, 0
    // Predicated region
    $region42: #{tpu_custom_call.1} parent=1 // pred_check
      %p68 = pneg %p67
    $region43: #{tpu_custom_call.1} parent=1 // pred_check_branch
      %70 = sbr.rel (%p68) target = $region45
    $region44: #{tpu_custom_call.1} parent=1 // pred_region
      %v71 = vld [vmem:[%s0] sm:$0xf]
      %v72 = vld [vmem:[%s0 + $0x4] sm:$0xf]
      %v73 = vld [vmem:[%s0 + $0x8] sm:$0xf]
      %v74 = vld [vmem:[%s0 + $0xc] sm:$0xf]
      %v75 = vld [vmem:[%s0 + $0x10] sm:$0xf]
      %v76 = vld [vmem:[%s0 + $0x14] sm:$0xf]
      %v77 = vld [vmem:[#allocation6] sm:$0xf]
      %v78 = vld [vmem:[#allocation6 + $0x4] sm:$0xf]
      %v79 = vld [vmem:[#allocation6 + $0x8] sm:$0xf]
      %v80 = vld [vmem:[#allocation6 + $0xc] sm:$0xf]
      %v81 = vld [vmem:[#allocation6 + $0x10] sm:$0xf]
      %v82 = vld [vmem:[#allocation6 + $0x14] sm:$0xf]
      %v83 = vld [vmem:[#allocation6 + $0x18] sm:$0xf]
      %v84 = vld [vmem:[#allocation6 + $0x1c] sm:$0xf]
      %v85 = vld [vmem:[#allocation6 + $0x20] sm:$0xf]
      %v86 = vld [vmem:[#allocation6 + $0x24] sm:$0xf]
      %v87 = vld [vmem:[#allocation6 + $0x28] sm:$0xf]
      %v88 = vld [vmem:[#allocation6 + $0x2c] sm:$0xf]
      %v89 = vld [vmem:[#allocation6 + $0x30] sm:$0xf]
      %v90 = vld [vmem:[#allocation6 + $0x34] sm:$0xf]
      %v91 = vld [vmem:[#allocation6 + $0x38] sm:$0xf]
      %v92 = vld [vmem:[#allocation6 + $0x3c] sm:$0xf]
      %v93 = vld [vmem:[#allocation9] sm:$0x1]
      %v95 = vlaneseq
      %v96 = vshrl.u32 %v95, 7
      %v97 = vsub.s32 0, %v96
      %v98 = vrot.slane %v93, %v97
      %v106 = vunpack.c.l.b16 %v71
      %v107 = vunpack.c.l.b16 %v72
      %v108 = vunpack.c.l.b16 %v73
      %v109 = vunpack.c.l.b16 %v74
      %v110 = vunpack.c.l.b16 %v75
      %v111 = vunpack.c.l.b16 %v76
      %v112 = vpack.c.b16 %v107, %v106
      %v113 = vpack.c.b16 %v109, %v108
      %v114 = vpack.c.b16 %v111, %v110
      %v134 = vunpack.c.l.b16 %v77
      %v135 = vunpack.c.l.b16 %v78
      %v136 = vunpack.c.l.b16 %v79
      %v137 = vunpack.c.l.b16 %v80
      %v138 = vunpack.c.l.b16 %v81
      %v139 = vunpack.c.l.b16 %v82
      %v140 = vunpack.c.l.b16 %v83
      %v141 = vunpack.c.l.b16 %v84
      %v142 = vunpack.c.l.b16 %v85
      %v143 = vunpack.c.l.b16 %v86
      %v144 = vunpack.c.l.b16 %v87
      %v145 = vunpack.c.l.b16 %v88
      %v146 = vunpack.c.l.b16 %v89
      %v147 = vunpack.c.l.b16 %v90
      %v148 = vunpack.c.l.b16 %v91
      %v149 = vunpack.c.l.b16 %v92
      %v150 = vpack.c.b16 %v135, %v134
      %v151 = vpack.c.b16 %v137, %v136
      %v152 = vpack.c.b16 %v139, %v138
      %v153 = vpack.c.b16 %v141, %v140
      %v154 = vpack.c.b16 %v143, %v142
      %v155 = vpack.c.b16 %v145, %v144
      %v156 = vpack.c.b16 %v147, %v146
      %v157 = vpack.c.b16 %v149, %v148
      %166 = vmatprep.subr.bf16.mxu0 0
      %167 = vmatpush1.bf16.msra.mxu0 %v157
      %168 = vmatprep.subr.bf16.mxu0 0
      %169 = vmatpush1.bf16.msra.mxu0 %v156
      %170 = vmatprep.subr.bf16.mxu0 0
      %171 = vmatpush1.bf16.msra.mxu0 %v155
      %172 = vmatprep.subr.bf16.mxu0 0
      %173 = vmatpush1.bf16.msra.mxu0 %v154
      %174 = vmatprep.subr.bf16.mxu0 0
      %175 = vmatpush1.bf16.msra.mxu0 %v153
      %176 = vmatprep.subr.bf16.mxu0 0
      %177 = vmatpush1.bf16.msra.mxu0 %v152
      %178 = vmatprep.subr.bf16.mxu0 0
      %179 = vmatpush1.bf16.msra.mxu0 %v151
      %180 = vmatprep.subr.bf16.mxu0 0
      %181 = vmatpush1.bf16.msra.mxu0 %v150
      %182 = vmatprep.subr.bf16.mxu0 0
      %183 = vmatpush2.bf16.msra.mxu0 0
      %184 = vmatprep.subr.bf16.mxu0 0
      %185 = vmatpush2.bf16.msra.mxu0 0
      %186 = vmatprep.subr.bf16.mxu0 0
      %187 = vmatpush2.bf16.msra.mxu0 0
      %188 = vmatprep.subr.bf16.mxu0 0
      %189 = vmatpush2.bf16.msra.mxu0 0
      %190 = vmatprep.subr.bf16.mxu0 0
      %191 = vmatpush2.bf16.msra.mxu0 0
      %192 = vmatprep.subr.bf16.mxu0 0
      %193 = vmatpush2.bf16.msra.mxu0 0
      %194 = vmatprep.subr.bf16.mxu0 0
      %195 = vmatpush2.bf16.msra.mxu0 0
      %196 = vmatprep.subr.bf16.mxu0 0
      %197 = vmatpush2.bf16.msra.mxu0 0
      %198 = vmatprep.mubr.bf16.mxu0 0
      %199 = vmatmul.mubr.bf16.gmra.mxu0 %v112
      %v200 = vpop.f32.mrf.mxu0
      %v201 = vadd.f32 %v98, %v200
      %v202 = vpop.f32.mrf.mxu0
      %v203 = vpop.f32.mrf.mxu0
      %v204 = vadd.f32 %v98, %v203
      %v205 = vpop.f32.mrf.mxu0
      %206 = vmatprep.mubr.bf16.mxu0 0
      %207 = vmatmul.mubr.bf16.gmra.mxu0 %v113
      %v208 = vpop.f32.mrf.mxu0
      %v209 = vadd.f32 %v98, %v208
      %v210 = vpop.f32.mrf.mxu0
      %v211 = vpop.f32.mrf.mxu0
      %v212 = vadd.f32 %v98, %v211
      %v213 = vpop.f32.mrf.mxu0
      %214 = vmatprep.mubr.bf16.mxu0 0
      %215 = vmatmul.mubr.bf16.gmra.mxu0 %v114
      %v216 = vpop.f32.mrf.mxu0
      %v217 = vadd.f32 %v98, %v216
      %v218 = vpop.f32.mrf.mxu0
      %v219 = vpop.f32.mrf.mxu0
      %v220 = vadd.f32 %v98, %v219
      %v221 = vpop.f32.mrf.mxu0
      %222 = vdwg.mxu0
      %v223 = vtanh.pop %v201
      %v224 = vtanh.pop %v204
      %v225 = vtanh.pop %v209
      %v226 = vtanh.pop %v212
      %v227 = vtanh.pop %v217
      %v228 = vtanh.pop %v220
      %v229 = vpack.c.bf16 %v224, %v223
      %v230 = vpack.c.bf16 %v226, %v225
      %v231 = vpack.c.bf16 %v228, %v227
      %v235 = vunpack.c.l.b16 %v229
      %v236 = vunpack.c.h.b16 %v229
      %v237 = vunpack.c.l.b16 %v230
      %v238 = vunpack.c.h.b16 %v230
      %v239 = vunpack.c.l.b16 %v231
      %v240 = vunpack.c.h.b16 %v231
      %v241 = vpack.c.b16 %v235, %v235
      %v242 = vpack.c.b16 %v236, %v236
      %v243 = vpack.c.b16 %v237, %v237
      %v244 = vpack.c.b16 %v238, %v238
      %v245 = vpack.c.b16 %v239, %v239
      %v246 = vpack.c.b16 %v240, %v240
      %253 = vst [vmem:[#allocation2] sm:$0xf] %v241
      %254 = vst [vmem:[#allocation2 + $0x4] sm:$0xf] %v242
      %255 = vst [vmem:[#allocation2 + $0x8] sm:$0xf] %v243
      %256 = vst [vmem:[#allocation2 + $0xc] sm:$0xf] %v244
      %257 = vst [vmem:[#allocation2 + $0x10] sm:$0xf] %v245
      %258 = vst [vmem:[#allocation2 + $0x14] sm:$0xf] %v246
      %vm259 = vcmask 7168
      %260 = vst.msk [vmem:[#allocation3] sm:$0xff] %vm259, -1e+30
      %261 = vst.msk [vmem:[#allocation3 + $0x8] sm:$0xff] %vm259, -1e+30
      %262 = vst.msk [vmem:[#allocation3 + $0x10] sm:$0xff] %vm259, -1e+30
      %263 = vst.msk [vmem:[#allocation3 + $0x18] sm:$0xff] %vm259, -1e+30
      %264 = vst.msk [vmem:[#allocation3 + $0x20] sm:$0xff] %vm259, -1e+30
      %265 = vst.msk [vmem:[#allocation3 + $0x28] sm:$0xff] %vm259, -1e+30
      %266 = vst.msk [vmem:[#allocation4] sm:$0xff] %vm259, 0.0
      %267 = vst.msk [vmem:[#allocation4 + $0x8] sm:$0xff] %vm259, 0.0
      %268 = vst.msk [vmem:[#allocation4 + $0x10] sm:$0xff] %vm259, 0.0
      %269 = vst.msk [vmem:[#allocation4 + $0x18] sm:$0xff] %vm259, 0.0
      %270 = vst.msk [vmem:[#allocation4 + $0x20] sm:$0xff] %vm259, 0.0
      %271 = vst.msk [vmem:[#allocation4 + $0x28] sm:$0xff] %vm259, 0.0
      %v272 = vunpack.c.l.bf16 %v229
      %v273 = vunpack.c.h.bf16 %v229
      %v274 = vunpack.c.l.bf16 %v230
      %v275 = vunpack.c.h.bf16 %v230
      %v276 = vunpack.c.l.bf16 %v231
      %v277 = vunpack.c.h.bf16 %v231
      %v278 = vld [vmem:[%s3] sm:$0xf]
      %v279 = vld [vmem:[%s3 + $0x4] sm:$0xf]
      %v280 = vld [vmem:[%s3 + $0x8] sm:$0xf]
      %v281 = vld [vmem:[%s3 + $0xc] sm:$0xf]
      %v282 = vld [vmem:[%s3 + $0x10] sm:$0xf]
      %v283 = vld [vmem:[%s3 + $0x14] sm:$0xf]
      %v284 = vunpack.c.l.bf16 %v278
      %v285 = vunpack.c.l.bf16 %v279
      %v286 = vunpack.c.l.bf16 %v280
      %v287 = vunpack.c.l.bf16 %v281
      %v288 = vunpack.c.l.bf16 %v282
      %v289 = vunpack.c.l.bf16 %v283
      %v290 = vmul.f32 %v272, %v284
      %v291 = vmul.f32 %v273, %v285
      %v292 = vmul.f32 %v274, %v286
      %v293 = vmul.f32 %v275, %v287
      %v294 = vmul.f32 %v276, %v288
      %v295 = vmul.f32 %v277, %v289
      %296 = vadd.xlane.f32.xlu0 %v290
      %v297 = vpop.xlane.xlu0 %296
      %298 = vadd.xlane.f32.xlu0 %v291
      %v299 = vpop.xlane.xlu0 %298
      %300 = vadd.xlane.f32.xlu0 %v292
      %v301 = vpop.xlane.xlu0 %300
      %302 = vadd.xlane.f32.xlu0 %v293
      %v303 = vpop.xlane.xlu0 %302
      %304 = vadd.xlane.f32.xlu0 %v294
      %v305 = vpop.xlane.xlu0 %304
      %306 = vadd.xlane.f32.xlu0 %v295
      %v307 = vpop.xlane.xlu0 %306
      %308 = vst.msk [vmem:[#allocation5] sm:$0xff] %vm259, %v297
      %309 = vst.msk [vmem:[#allocation5 + $0x8] sm:$0xff] %vm259, %v299
      %310 = vst.msk [vmem:[#allocation5 + $0x10] sm:$0xff] %vm259, %v301
      %311 = vst.msk [vmem:[#allocation5 + $0x18] sm:$0xff] %vm259, %v303
      %312 = vst.msk [vmem:[#allocation5 + $0x20] sm:$0xff] %vm259, %v305
      %313 = vst.msk [vmem:[#allocation5 + $0x28] sm:$0xff] %vm259, %v307
    $region45: #{tpu_custom_call.1} parent=1 // pred_fallthru
      _
    %v314 = vld [vmem:[#allocation2] sm:$0xf]
    %v315 = vld [vmem:[#allocation2 + $0x4] sm:$0xf]
    %v316 = vld [vmem:[#allocation2 + $0x8] sm:$0xf]
    %v317 = vld [vmem:[#allocation2 + $0xc] sm:$0xf]
    %v318 = vld [vmem:[#allocation2 + $0x10] sm:$0xf]
    %v319 = vld [vmem:[#allocation2 + $0x14] sm:$0xf]
    %v320 = vld [vmem:[#allocation11] sm:$0xff]
    %v321 = vld [vmem:[#allocation11 + $0x8] sm:$0xff]
    %v322 = vld [vmem:[#allocation11 + $0x10] sm:$0xff]
    %v323 = vld [vmem:[#allocation11 + $0x18] sm:$0xff]
    %v324 = vld [vmem:[#allocation11 + $0x20] sm:$0xff]
    %v325 = vld [vmem:[#allocation11 + $0x28] sm:$0xff]
    %v326 = vld [vmem:[#allocation11 + $0x30] sm:$0xff]
    %v327 = vld [vmem:[#allocation11 + $0x38] sm:$0xff]
    %v328 = vld [vmem:[#allocation11 + $0x40] sm:$0xff]
    %v329 = vld [vmem:[#allocation11 + $0x48] sm:$0xff]
    %v330 = vld [vmem:[#allocation11 + $0x50] sm:$0xff]
    %v331 = vld [vmem:[#allocation11 + $0x58] sm:$0xff]
    %v332 = vld [vmem:[#allocation11 + $0x60] sm:$0xff]
    %v333 = vld [vmem:[#allocation11 + $0x68] sm:$0xff]
    %v334 = vld [vmem:[#allocation11 + $0x70] sm:$0xff]
    %v335 = vld [vmem:[#allocation11 + $0x78] sm:$0xff]
    %v336 = vld [vmem:[#allocation11 + $0x80] sm:$0xff]
    %v337 = vld [vmem:[#allocation11 + $0x88] sm:$0xff]
    %v338 = vld [vmem:[#allocation11 + $0x90] sm:$0xff]
    %v339 = vld [vmem:[#allocation11 + $0x98] sm:$0xff]
    %v340 = vld [vmem:[#allocation11 + $0xa0] sm:$0xff]
    %v341 = vld [vmem:[#allocation11 + $0xa8] sm:$0xff]
    %v342 = vld [vmem:[#allocation11 + $0xb0] sm:$0xff]
    %v343 = vld [vmem:[#allocation11 + $0xb8] sm:$0xff]
    %v344 = vld [vmem:[#allocation11 + $0xc0] sm:$0xff]
    %v345 = vld [vmem:[#allocation11 + $0xc8] sm:$0xff]
    %v346 = vld [vmem:[#allocation11 + $0xd0] sm:$0xff]
    %v347 = vld [vmem:[#allocation11 + $0xd8] sm:$0xff]
    %v348 = vld [vmem:[#allocation11 + $0xe0] sm:$0xff]
    %v349 = vld [vmem:[#allocation11 + $0xe8] sm:$0xff]
    %v350 = vld [vmem:[#allocation11 + $0xf0] sm:$0xff]
    %v351 = vld [vmem:[#allocation11 + $0xf8] sm:$0xff]
    %v352 = vld [vmem:[#allocation11 + $0x100] sm:$0xff]
    %v353 = vld [vmem:[#allocation11 + $0x108] sm:$0xff]
    %v354 = vld [vmem:[#allocation11 + $0x110] sm:$0xff]
    %v355 = vld [vmem:[#allocation11 + $0x118] sm:$0xff]
    %v356 = vld [vmem:[#allocation11 + $0x120] sm:$0xff]
    %v357 = vld [vmem:[#allocation11 + $0x128] sm:$0xff]
    %v358 = vld [vmem:[#allocation11 + $0x130] sm:$0xff]
    %v359 = vld [vmem:[#allocation11 + $0x138] sm:$0xff]
    %v360 = vld [vmem:[#allocation11 + $0x140] sm:$0xff]
    %v361 = vld [vmem:[#allocation11 + $0x148] sm:$0xff]
    %v362 = vld [vmem:[#allocation11 + $0x150] sm:$0xff]
    %v363 = vld [vmem:[#allocation11 + $0x158] sm:$0xff]
    %v364 = vld [vmem:[#allocation11 + $0x160] sm:$0xff]
    %v365 = vld [vmem:[#allocation11 + $0x168] sm:$0xff]
    %v366 = vld [vmem:[#allocation11 + $0x170] sm:$0xff]
    %v367 = vld [vmem:[#allocation11 + $0x178] sm:$0xff]
    %v368 = vld [vmem:[#allocation11 + $0x180] sm:$0xff]
    %v369 = vld [vmem:[#allocation11 + $0x188] sm:$0xff]
    %v370 = vld [vmem:[#allocation11 + $0x190] sm:$0xff]
    %v371 = vld [vmem:[#allocation11 + $0x198] sm:$0xff]
    %v372 = vld [vmem:[#allocation11 + $0x1a0] sm:$0xff]
    %v373 = vld [vmem:[#allocation11 + $0x1a8] sm:$0xff]
    %v374 = vld [vmem:[#allocation11 + $0x1b0] sm:$0xff]
    %v375 = vld [vmem:[#allocation11 + $0x1b8] sm:$0xff]
    %v376 = vld [vmem:[#allocation11 + $0x1c0] sm:$0xff]
    %v377 = vld [vmem:[#allocation11 + $0x1c8] sm:$0xff]
    %v378 = vld [vmem:[#allocation11 + $0x1d0] sm:$0xff]
    %v379 = vld [vmem:[#allocation11 + $0x1d8] sm:$0xff]
    %v380 = vld [vmem:[#allocation11 + $0x1e0] sm:$0xff]
    %v381 = vld [vmem:[#allocation11 + $0x1e8] sm:$0xff]
    %v382 = vld [vmem:[#allocation11 + $0x1f0] sm:$0xff]
    %v383 = vld [vmem:[#allocation11 + $0x1f8] sm:$0xff]
    %v390 = vunpack.c.l.b16 %v314
    %v391 = vunpack.c.l.b16 %v315
    %v392 = vunpack.c.l.b16 %v316
    %v393 = vunpack.c.l.b16 %v317
    %v394 = vunpack.c.l.b16 %v318
    %v395 = vunpack.c.l.b16 %v319
    %v396 = vpack.c.b16 %v391, %v390
    %v397 = vpack.c.b16 %v393, %v392
    %v398 = vpack.c.b16 %v395, %v394
    %v466 = vunpack.c.l.b16 %v320
    %v467 = vunpack.c.h.b16 %v320
    %v468 = vunpack.c.l.b16 %v321
    %v469 = vunpack.c.h.b16 %v321
    %v470 = vunpack.c.l.b16 %v322
    %v471 = vunpack.c.h.b16 %v322
    %v472 = vunpack.c.l.b16 %v323
    %v473 = vunpack.c.h.b16 %v323
    %v474 = vunpack.c.l.b16 %v324
    %v475 = vunpack.c.h.b16 %v324
    %v476 = vunpack.c.l.b16 %v325
    %v477 = vunpack.c.h.b16 %v325
    %v478 = vunpack.c.l.b16 %v326
    %v479 = vunpack.c.h.b16 %v326
    %v480 = vunpack.c.l.b16 %v327
    %v481 = vunpack.c.h.b16 %v327
    %v482 = vunpack.c.l.b16 %v328
    %v483 = vunpack.c.h.b16 %v328
    %v484 = vunpack.c.l.b16 %v329
    %v485 = vunpack.c.h.b16 %v329
    %v486 = vunpack.c.l.b16 %v330
    %v487 = vunpack.c.h.b16 %v330
    %v488 = vunpack.c.l.b16 %v331
    %v489 = vunpack.c.h.b16 %v331
    %v490 = vunpack.c.l.b16 %v332
    %v491 = vunpack.c.h.b16 %v332
    %v492 = vunpack.c.l.b16 %v333
    %v493 = vunpack.c.h.b16 %v333
    %v494 = vunpack.c.l.b16 %v334
    %v495 = vunpack.c.h.b16 %v334
    %v496 = vunpack.c.l.b16 %v335
    %v497 = vunpack.c.h.b16 %v335
    %v498 = vunpack.c.l.b16 %v336
    %v499 = vunpack.c.h.b16 %v336
    %v500 = vunpack.c.l.b16 %v337
    %v501 = vunpack.c.h.b16 %v337
    %v502 = vunpack.c.l.b16 %v338
    %v503 = vunpack.c.h.b16 %v338
    %v504 = vunpack.c.l.b16 %v339
    %v505 = vunpack.c.h.b16 %v339
    %v506 = vunpack.c.l.b16 %v340
    %v507 = vunpack.c.h.b16 %v340
    %v508 = vunpack.c.l.b16 %v341
    %v509 = vunpack.c.h.b16 %v341
    %v510 = vunpack.c.l.b16 %v342
    %v511 = vunpack.c.h.b16 %v342
    %v512 = vunpack.c.l.b16 %v343
    %v513 = vunpack.c.h.b16 %v343
    %v514 = vunpack.c.l.b16 %v344
    %v515 = vunpack.c.h.b16 %v344
    %v516 = vunpack.c.l.b16 %v345
    %v517 = vunpack.c.h.b16 %v345
    %v518 = vunpack.c.l.b16 %v346
    %v519 = vunpack.c.h.b16 %v346
    %v520 = vunpack.c.l.b16 %v347
    %v521 = vunpack.c.h.b16 %v347
    %v522 = vunpack.c.l.b16 %v348
    %v523 = vunpack.c.h.b16 %v348
    %v524 = vunpack.c.l.b16 %v349
    %v525 = vunpack.c.h.b16 %v349
    %v526 = vunpack.c.l.b16 %v350
    %v527 = vunpack.c.h.b16 %v350
    %v528 = vunpack.c.l.b16 %v351
    %v529 = vunpack.c.h.b16 %v351
    %v530 = vunpack.c.l.b16 %v352
    %v531 = vunpack.c.h.b16 %v352
    %v532 = vunpack.c.l.b16 %v353
    %v533 = vunpack.c.h.b16 %v353
    %v534 = vunpack.c.l.b16 %v354
    %v535 = vunpack.c.h.b16 %v354
    %v536 = vunpack.c.l.b16 %v355
    %v537 = vunpack.c.h.b16 %v355
    %v538 = vunpack.c.l.b16 %v356
    %v539 = vunpack.c.h.b16 %v356
    %v540 = vunpack.c.l.b16 %v357
    %v541 = vunpack.c.h.b16 %v357
    %v542 = vunpack.c.l.b16 %v358
    %v543 = vunpack.c.h.b16 %v358
    %v544 = vunpack.c.l.b16 %v359
    %v545 = vunpack.c.h.b16 %v359
    %v546 = vunpack.c.l.b16 %v360
    %v547 = vunpack.c.h.b16 %v360
    %v548 = vunpack.c.l.b16 %v361
    %v549 = vunpack.c.h.b16 %v361
    %v550 = vunpack.c.l.b16 %v362
    %v551 = vunpack.c.h.b16 %v362
    %v552 = vunpack.c.l.b16 %v363
    %v553 = vunpack.c.h.b16 %v363
    %v554 = vunpack.c.l.b16 %v364
    %v555 = vunpack.c.h.b16 %v364
    %v556 = vunpack.c.l.b16 %v365
    %v557 = vunpack.c.h.b16 %v365
    %v558 = vunpack.c.l.b16 %v366
    %v559 = vunpack.c.h.b16 %v366
    %v560 = vunpack.c.l.b16 %v367
    %v561 = vunpack.c.h.b16 %v367
    %v562 = vunpack.c.l.b16 %v368
    %v563 = vunpack.c.h.b16 %v368
    %v564 = vunpack.c.l.b16 %v369
    %v565 = vunpack.c.h.b16 %v369
    %v566 = vunpack.c.l.b16 %v370
    %v567 = vunpack.c.h.b16 %v370
    %v568 = vunpack.c.l.b16 %v371
    %v569 = vunpack.c.h.b16 %v371
    %v570 = vunpack.c.l.b16 %v372
    %v571 = vunpack.c.h.b16 %v372
    %v572 = vunpack.c.l.b16 %v373
    %v573 = vunpack.c.h.b16 %v373
    %v574 = vunpack.c.l.b16 %v374
    %v575 = vunpack.c.h.b16 %v374
    %v576 = vunpack.c.l.b16 %v375
    %v577 = vunpack.c.h.b16 %v375
    %v578 = vunpack.c.l.b16 %v376
    %v579 = vunpack.c.h.b16 %v376
    %v580 = vunpack.c.l.b16 %v377
    %v581 = vunpack.c.h.b16 %v377
    %v582 = vunpack.c.l.b16 %v378
    %v583 = vunpack.c.h.b16 %v378
    %v584 = vunpack.c.l.b16 %v379
    %v585 = vunpack.c.h.b16 %v379
    %v586 = vunpack.c.l.b16 %v380
    %v587 = vunpack.c.h.b16 %v380
    %v588 = vunpack.c.l.b16 %v381
    %v589 = vunpack.c.h.b16 %v381
    %v590 = vunpack.c.l.b16 %v382
    %v591 = vunpack.c.h.b16 %v382
    %v592 = vunpack.c.l.b16 %v383
    %v593 = vunpack.c.h.b16 %v383
    %v594 = vpack.c.b16 %v474, %v466
    %v595 = vpack.c.b16 %v475, %v467
    %v596 = vpack.c.b16 %v476, %v468
    %v597 = vpack.c.b16 %v477, %v469
    %v598 = vpack.c.b16 %v478, %v470
    %v599 = vpack.c.b16 %v479, %v471
    %v600 = vpack.c.b16 %v480, %v472
    %v601 = vpack.c.b16 %v481, %v473
    %v602 = vpack.c.b16 %v490, %v482
    %v603 = vpack.c.b16 %v491, %v483
    %v604 = vpack.c.b16 %v492, %v484
    %v605 = vpack.c.b16 %v493, %v485
    %v606 = vpack.c.b16 %v494, %v486
    %v607 = vpack.c.b16 %v495, %v487
    %v608 = vpack.c.b16 %v496, %v488
    %v609 = vpack.c.b16 %v497, %v489
    %v610 = vpack.c.b16 %v506, %v498
    %v611 = vpack.c.b16 %v507, %v499
    %v612 = vpack.c.b16 %v508, %v500
    %v613 = vpack.c.b16 %v509, %v501
    %v614 = vpack.c.b16 %v510, %v502
    %v615 = vpack.c.b16 %v511, %v503
    %v616 = vpack.c.b16 %v512, %v504
    %v617 = vpack.c.b16 %v513, %v505
    %v618 = vpack.c.b16 %v522, %v514
    %v619 = vpack.c.b16 %v523, %v515
    %v620 = vpack.c.b16 %v524, %v516
    %v621 = vpack.c.b16 %v525, %v517
    %v622 = vpack.c.b16 %v526, %v518
    %v623 = vpack.c.b16 %v527, %v519
    %v624 = vpack.c.b16 %v528, %v520
    %v625 = vpack.c.b16 %v529, %v521
    %v626 = vpack.c.b16 %v538, %v530
    %v627 = vpack.c.b16 %v539, %v531
    %v628 = vpack.c.b16 %v540, %v532
    %v629 = vpack.c.b16 %v541, %v533
    %v630 = vpack.c.b16 %v542, %v534
    %v631 = vpack.c.b16 %v543, %v535
    %v632 = vpack.c.b16 %v544, %v536
    %v633 = vpack.c.b16 %v545, %v537
    %v634 = vpack.c.b16 %v554, %v546
    %v635 = vpack.c.b16 %v555, %v547
    %v636 = vpack.c.b16 %v556, %v548
    %v637 = vpack.c.b16 %v557, %v549
    %v638 = vpack.c.b16 %v558, %v550
    %v639 = vpack.c.b16 %v559, %v551
    %v640 = vpack.c.b16 %v560, %v552
    %v641 = vpack.c.b16 %v561, %v553
    %v642 = vpack.c.b16 %v570, %v562
    %v643 = vpack.c.b16 %v571, %v563
    %v644 = vpack.c.b16 %v572, %v564
    %v645 = vpack.c.b16 %v573, %v565
    %v646 = vpack.c.b16 %v574, %v566
    %v647 = vpack.c.b16 %v575, %v567
    %v648 = vpack.c.b16 %v576, %v568
    %v649 = vpack.c.b16 %v577, %v569
    %v650 = vpack.c.b16 %v586, %v578
    %v651 = vpack.c.b16 %v587, %v579
    %v652 = vpack.c.b16 %v588, %v580
    %v653 = vpack.c.b16 %v589, %v581
    %v654 = vpack.c.b16 %v590, %v582
    %v655 = vpack.c.b16 %v591, %v583
    %v656 = vpack.c.b16 %v592, %v584
    %v657 = vpack.c.b16 %v593, %v585
    %722 = vmatprep.subr.bf16.mxu0 %v651
    %723 = vmatpush1.bf16.msra.mxu0 %v650
    %724 = vmatprep.subr.bf16.mxu0 %v643
    %725 = vmatpush1.bf16.msra.mxu0 %v642
    %726 = vmatprep.subr.bf16.mxu0 %v635
    %727 = vmatpush1.bf16.msra.mxu0 %v634
    %728 = vmatprep.subr.bf16.mxu0 %v627
    %729 = vmatpush1.bf16.msra.mxu0 %v626
    %730 = vmatprep.subr.bf16.mxu0 %v619
    %731 = vmatpush1.bf16.msra.mxu0 %v618
    %732 = vmatprep.subr.bf16.mxu0 %v611
    %733 = vmatpush1.bf16.msra.mxu0 %v610
    %734 = vmatprep.subr.bf16.mxu0 %v603
    %735 = vmatpush1.bf16.msra.mxu0 %v602
    %736 = vmatprep.subr.bf16.mxu0 %v595
    %737 = vmatpush1.bf16.msra.mxu0 %v594
    %738 = vmatprep.subr.bf16.mxu0 0
    %739 = vmatpush2.bf16.msra.mxu0 0
    %740 = vmatprep.subr.bf16.mxu0 0
    %741 = vmatpush2.bf16.msra.mxu0 0
    %742 = vmatprep.subr.bf16.mxu0 0
    %743 = vmatpush2.bf16.msra.mxu0 0
    %744 = vmatprep.subr.bf16.mxu0 0
    %745 = vmatpush2.bf16.msra.mxu0 0
    %746 = vmatprep.subr.bf16.mxu0 0
    %747 = vmatpush2.bf16.msra.mxu0 0
    %748 = vmatprep.subr.bf16.mxu0 0
    %749 = vmatpush2.bf16.msra.mxu0 0
    %750 = vmatprep.subr.bf16.mxu0 0
    %751 = vmatpush2.bf16.msra.mxu0 0
    %752 = vmatprep.subr.bf16.mxu0 0
    %753 = vmatpush2.bf16.msra.mxu0 0
    %754 = vmatprep.mubr.bf16.mxu0 0
    %755 = vmatmul.mubr.bf16.gmra.mxu0 %v396
    %v756 = vpop.f32.mrf.mxu0
    %v757 = vadd.f32 0.0, %v756
    %v758 = vpop.f32.mrf.mxu0
    %v759 = vadd.f32 0.0, %v758
    %v760 = vpop.f32.mrf.mxu0
    %v761 = vadd.f32 0.0, %v760
    %v762 = vpop.f32.mrf.mxu0
    %v763 = vadd.f32 0.0, %v762
    %764 = vmatprep.mubr.bf16.mxu0 0
    %765 = vmatmul.mubr.bf16.gmra.mxu0 %v397
    %v766 = vpop.f32.mrf.mxu0
    %v767 = vadd.f32 0.0, %v766
    %v768 = vpop.f32.mrf.mxu0
    %v769 = vadd.f32 0.0, %v768
    %v770 = vpop.f32.mrf.mxu0
    %v771 = vadd.f32 0.0, %v770
    %v772 = vpop.f32.mrf.mxu0
    %v773 = vadd.f32 0.0, %v772
    %774 = vmatprep.mubr.bf16.mxu0 0
    %775 = vmatmul.mubr.bf16.gmra.mxu0 %v398
    %v776 = vpop.f32.mrf.mxu0
    %v777 = vadd.f32 0.0, %v776
    %v778 = vpop.f32.mrf.mxu0
    %v779 = vadd.f32 0.0, %v778
    %v780 = vpop.f32.mrf.mxu0
    %v781 = vadd.f32 0.0, %v780
    %v782 = vpop.f32.mrf.mxu0
    %v783 = vadd.f32 0.0, %v782
    %784 = vdwg.mxu0
    %785 = vmatprep.subr.bf16.mxu0 %v653
    %786 = vmatpush1.bf16.msra.mxu0 %v652
    %787 = vmatprep.subr.bf16.mxu0 %v645
    %788 = vmatpush1.bf16.msra.mxu0 %v644
    %789 = vmatprep.subr.bf16.mxu0 %v637
    %790 = vmatpush1.bf16.msra.mxu0 %v636
    %791 = vmatprep.subr.bf16.mxu0 %v629
    %792 = vmatpush1.bf16.msra.mxu0 %v628
    %793 = vmatprep.subr.bf16.mxu0 %v621
    %794 = vmatpush1.bf16.msra.mxu0 %v620
    %795 = vmatprep.subr.bf16.mxu0 %v613
    %796 = vmatpush1.bf16.msra.mxu0 %v612
    %797 = vmatprep.subr.bf16.mxu0 %v605
    %798 = vmatpush1.bf16.msra.mxu0 %v604
    %799 = vmatprep.subr.bf16.mxu0 %v597
    %800 = vmatpush1.bf16.msra.mxu0 %v596
    %801 = vmatprep.subr.bf16.mxu0 0
    %802 = vmatpush2.bf16.msra.mxu0 0
    %803 = vmatprep.subr.bf16.mxu0 0
    %804 = vmatpush2.bf16.msra.mxu0 0
    %805 = vmatprep.subr.bf16.mxu0 0
    %806 = vmatpush2.bf16.msra.mxu0 0
    %807 = vmatprep.subr.bf16.mxu0 0
    %808 = vmatpush2.bf16.msra.mxu0 0
    %809 = vmatprep.subr.bf16.mxu0 0
    %810 = vmatpush2.bf16.msra.mxu0 0
    %811 = vmatprep.subr.bf16.mxu0 0
    %812 = vmatpush2.bf16.msra.mxu0 0
    %813 = vmatprep.subr.bf16.mxu0 0
    %814 = vmatpush2.bf16.msra.mxu0 0
    %815 = vmatprep.subr.bf16.mxu0 0
    %816 = vmatpush2.bf16.msra.mxu0 0
    %817 = vmatprep.mubr.bf16.mxu0 0
    %818 = vmatmul.mubr.bf16.gmra.mxu0 %v396
    %v819 = vpop.f32.mrf.mxu0
    %v820 = vadd.f32 0.0, %v819
    %v821 = vpop.f32.mrf.mxu0
    %v822 = vadd.f32 0.0, %v821
    %v823 = vpop.f32.mrf.mxu0
    %v824 = vadd.f32 0.0, %v823
    %v825 = vpop.f32.mrf.mxu0
    %v826 = vadd.f32 0.0, %v825
    %827 = vmatprep.mubr.bf16.mxu0 0
    %828 = vmatmul.mubr.bf16.gmra.mxu0 %v397
    %v829 = vpop.f32.mrf.mxu0
    %v830 = vadd.f32 0.0, %v829
    %v831 = vpop.f32.mrf.mxu0
    %v832 = vadd.f32 0.0, %v831
    %v833 = vpop.f32.mrf.mxu0
    %v834 = vadd.f32 0.0, %v833
    %v835 = vpop.f32.mrf.mxu0
    %v836 = vadd.f32 0.0, %v835
    %837 = vmatprep.mubr.bf16.mxu0 0
    %838 = vmatmul.mubr.bf16.gmra.mxu0 %v398
    %v839 = vpop.f32.mrf.mxu0
    %v840 = vadd.f32 0.0, %v839
    %v841 = vpop.f32.mrf.mxu0
    %v842 = vadd.f32 0.0, %v841
    %v843 = vpop.f32.mrf.mxu0
    %v844 = vadd.f32 0.0, %v843
    %v845 = vpop.f32.mrf.mxu0
    %v846 = vadd.f32 0.0, %v845
    %847 = vdwg.mxu0
    %848 = vmatprep.subr.bf16.mxu0 %v655
    %849 = vmatpush1.bf16.msra.mxu0 %v654
    %850 = vmatprep.subr.bf16.mxu0 %v647
    %851 = vmatpush1.bf16.msra.mxu0 %v646
    %852 = vmatprep.subr.bf16.mxu0 %v639
    %853 = vmatpush1.bf16.msra.mxu0 %v638
    %854 = vmatprep.subr.bf16.mxu0 %v631
    %855 = vmatpush1.bf16.msra.mxu0 %v630
    %856 = vmatprep.subr.bf16.mxu0 %v623
    %857 = vmatpush1.bf16.msra.mxu0 %v622
    %858 = vmatprep.subr.bf16.mxu0 %v615
    %859 = vmatpush1.bf16.msra.mxu0 %v614
    %860 = vmatprep.subr.bf16.mxu0 %v607
    %861 = vmatpush1.bf16.msra.mxu0 %v606
    %862 = vmatprep.subr.bf16.mxu0 %v599
    %863 = vmatpush1.bf16.msra.mxu0 %v598
    %864 = vmatprep.subr.bf16.mxu0 0
    %865 = vmatpush2.bf16.msra.mxu0 0
    %866 = vmatprep.subr.bf16.mxu0 0
    %867 = vmatpush2.bf16.msra.mxu0 0
    %868 = vmatprep.subr.bf16.mxu0 0
    %869 = vmatpush2.bf16.msra.mxu0 0
    %870 = vmatprep.subr.bf16.mxu0 0
    %871 = vmatpush2.bf16.msra.mxu0 0
    %872 = vmatprep.subr.bf16.mxu0 0
    %873 = vmatpush2.bf16.msra.mxu0 0
    %874 = vmatprep.subr.bf16.mxu0 0
    %875 = vmatpush2.bf16.msra.mxu0 0
    %876 = vmatprep.subr.bf16.mxu0 0
    %877 = vmatpush2.bf16.msra.mxu0 0
    %878 = vmatprep.subr.bf16.mxu0 0
    %879 = vmatpush2.bf16.msra.mxu0 0
    %880 = vmatprep.mubr.bf16.mxu0 0
    %881 = vmatmul.mubr.bf16.gmra.mxu0 %v396
    %v882 = vpop.f32.mrf.mxu0
    %v883 = vadd.f32 0.0, %v882
    %v884 = vpop.f32.mrf.mxu0
    %v885 = vadd.f32 0.0, %v884
    %v886 = vpop.f32.mrf.mxu0
    %v887 = vadd.f32 0.0, %v886
    %v888 = vpop.f32.mrf.mxu0
    %v889 = vadd.f32 0.0, %v888
    %890 = vmatprep.mubr.bf16.mxu0 0
    %891 = vmatmul.mubr.bf16.gmra.mxu0 %v397
    %v892 = vpop.f32.mrf.mxu0
    %v893 = vadd.f32 0.0, %v892
    %v894 = vpop.f32.mrf.mxu0
    %v895 = vadd.f32 0.0, %v894
    %v896 = vpop.f32.mrf.mxu0
    %v897 = vadd.f32 0.0, %v896
    %v898 = vpop.f32.mrf.mxu0
    %v899 = vadd.f32 0.0, %v898
    %900 = vmatprep.mubr.bf16.mxu0 0
    %901 = vmatmul.mubr.bf16.gmra.mxu0 %v398
    %v902 = vpop.f32.mrf.mxu0
    %v903 = vadd.f32 0.0, %v902
    %v904 = vpop.f32.mrf.mxu0
    %v905 = vadd.f32 0.0, %v904
    %v906 = vpop.f32.mrf.mxu0
    %v907 = vadd.f32 0.0, %v906
    %v908 = vpop.f32.mrf.mxu0
    %v909 = vadd.f32 0.0, %v908
    %910 = vdwg.mxu0
    %911 = vmatprep.subr.bf16.mxu0 %v657
    %912 = vmatpush1.bf16.msra.mxu0 %v656
    %913 = vmatprep.subr.bf16.mxu0 %v649
    %914 = vmatpush1.bf16.msra.mxu0 %v648
    %915 = vmatprep.subr.bf16.mxu0 %v641
    %916 = vmatpush1.bf16.msra.mxu0 %v640
    %917 = vmatprep.subr.bf16.mxu0 %v633
    %918 = vmatpush1.bf16.msra.mxu0 %v632
    %919 = vmatprep.subr.bf16.mxu0 %v625
    %920 = vmatpush1.bf16.msra.mxu0 %v624
    %921 = vmatprep.subr.bf16.mxu0 %v617
    %922 = vmatpush1.bf16.msra.mxu0 %v616
    %923 = vmatprep.subr.bf16.mxu0 %v609
    %924 = vmatpush1.bf16.msra.mxu0 %v608
    %925 = vmatprep.subr.bf16.mxu0 %v601
    %926 = vmatpush1.bf16.msra.mxu0 %v600
    %927 = vmatprep.subr.bf16.mxu0 0
    %928 = vmatpush2.bf16.msra.mxu0 0
    %929 = vmatprep.subr.bf16.mxu0 0
    %930 = vmatpush2.bf16.msra.mxu0 0
    %931 = vmatprep.subr.bf16.mxu0 0
    %932 = vmatpush2.bf16.msra.mxu0 0
    %933 = vmatprep.subr.bf16.mxu0 0
    %934 = vmatpush2.bf16.msra.mxu0 0
    %935 = vmatprep.subr.bf16.mxu0 0
    %936 = vmatpush2.bf16.msra.mxu0 0
    %937 = vmatprep.subr.bf16.mxu0 0
    %938 = vmatpush2.bf16.msra.mxu0 0
    %939 = vmatprep.subr.bf16.mxu0 0
    %940 = vmatpush2.bf16.msra.mxu0 0
    %941 = vmatprep.subr.bf16.mxu0 0
    %942 = vmatpush2.bf16.msra.mxu0 0
    %943 = vmatprep.mubr.bf16.mxu0 0
    %944 = vmatmul.mubr.bf16.gmra.mxu0 %v396
    %v945 = vpop.f32.mrf.mxu0
    %v946 = vadd.f32 0.0, %v945
    %v947 = vpop.f32.mrf.mxu0
    %v948 = vadd.f32 0.0, %v947
    %v949 = vpop.f32.mrf.mxu0
    %v950 = vadd.f32 0.0, %v949
    %v951 = vpop.f32.mrf.mxu0
    %v952 = vadd.f32 0.0, %v951
    %953 = vmatprep.mubr.bf16.mxu0 0
    %954 = vmatmul.mubr.bf16.gmra.mxu0 %v397
    %v955 = vpop.f32.mrf.mxu0
    %v956 = vadd.f32 0.0, %v955
    %v957 = vpop.f32.mrf.mxu0
    %v958 = vadd.f32 0.0, %v957
    %v959 = vpop.f32.mrf.mxu0
    %v960 = vadd.f32 0.0, %v959
    %v961 = vpop.f32.mrf.mxu0
    %v962 = vadd.f32 0.0, %v961
    %963 = vmatprep.mubr.bf16.mxu0 0
    %964 = vmatmul.mubr.bf16.gmra.mxu0 %v398
    %v965 = vpop.f32.mrf.mxu0
    %v966 = vadd.f32 0.0, %v965
    %v967 = vpop.f32.mrf.mxu0
    %v968 = vadd.f32 0.0, %v967
    %v969 = vpop.f32.mrf.mxu0
    %v970 = vadd.f32 0.0, %v969
    %v971 = vpop.f32.mrf.mxu0
    %v972 = vadd.f32 0.0, %v971
    %973 = vdwg.mxu0
    %s974 = sadd.s32 0, 1
    %s975 = smul.u32 %s974, 1024
    %p976 = scmp.gt.s32.totalorder %s975, 512
    // Predicated region
    $region46: #{tpu_custom_call.1} parent=1 // pred_check
      %p977 = pneg %p976
    $region47: #{tpu_custom_call.1} parent=1 // pred_check_branch
      %979 = sbr.rel (%p977) target = $region49
    $region48: #{tpu_custom_call.1} parent=1 // pred_region
      %v980 = vld [vmem:[%s5] sm:$0xff]
      %v982 = vlaneseq
      %v983 = vshrl.u32 %v982, 7
      %v984 = vsub.s32 0, %v983
      %v985 = vrot.slane %v980, %v984
      %v986 = vlaneseq
      %v987 = vshrl.u32 %v986, 7
      %v988 = vsub.s32 1, %v987
      %v989 = vrot.slane %v980, %v988
      %v990 = vlaneseq
      %v991 = vshrl.u32 %v990, 7
      %v992 = vsub.s32 2, %v991
      %v993 = vrot.slane %v980, %v992
      %v994 = vlaneseq
      %v995 = vshrl.u32 %v994, 7
      %v996 = vsub.s32 3, %v995
      %v997 = vrot.slane %v980, %v996
      %v998 = vlaneseq
      %v999 = vshrl.u32 %v998, 7
      %v1000 = vsub.s32 4, %v999
      %v1001 = vrot.slane %v980, %v1000
      %v1002 = vlaneseq
      %v1003 = vshrl.u32 %v1002, 7
      %v1004 = vsub.s32 5, %v1003
      %v1005 = vrot.slane %v980, %v1004
      %v1006 = vlaneseq
      %v1007 = vshrl.u32 %v1006, 7
      %v1008 = vsub.s32 6, %v1007
      %v1009 = vrot.slane %v980, %v1008
      %v1010 = vlaneseq
      %v1011 = vshrl.u32 %v1010, 7
      %v1012 = vsub.s32 7, %v1011
      %v1013 = vrot.slane %v980, %v1012
      %v1022 = vadd.f32 %v757, %v985
      %v1023 = vadd.f32 %v759, %v989
      %v1024 = vadd.f32 %v820, %v993
      %v1025 = vadd.f32 %v822, %v997
      %v1026 = vadd.f32 %v883, %v1001
      %v1027 = vadd.f32 %v885, %v1005
      %v1028 = vadd.f32 %v946, %v1009
      %v1029 = vadd.f32 %v948, %v1013
      %v1030 = vadd.f32 %v761, %v985
      %v1031 = vadd.f32 %v763, %v989
      %v1032 = vadd.f32 %v824, %v993
      %v1033 = vadd.f32 %v826, %v997
      %v1034 = vadd.f32 %v887, %v1001
      %v1035 = vadd.f32 %v889, %v1005
      %v1036 = vadd.f32 %v950, %v1009
      %v1037 = vadd.f32 %v952, %v1013
      %v1038 = vadd.f32 %v767, %v985
      %v1039 = vadd.f32 %v769, %v989
      %v1040 = vadd.f32 %v830, %v993
      %v1041 = vadd.f32 %v832, %v997
      %v1042 = vadd.f32 %v893, %v1001
      %v1043 = vadd.f32 %v895, %v1005
      %v1044 = vadd.f32 %v956, %v1009
      %v1045 = vadd.f32 %v958, %v1013
      %v1046 = vadd.f32 %v771, %v985
      %v1047 = vadd.f32 %v773, %v989
      %v1048 = vadd.f32 %v834, %v993
      %v1049 = vadd.f32 %v836, %v997
      %v1050 = vadd.f32 %v897, %v1001
      %v1051 = vadd.f32 %v899, %v1005
      %v1052 = vadd.f32 %v960, %v1009
      %v1053 = vadd.f32 %v962, %v1013
      %v1054 = vadd.f32 %v777, %v985
      %v1055 = vadd.f32 %v779, %v989
      %v1056 = vadd.f32 %v840, %v993
      %v1057 = vadd.f32 %v842, %v997
      %v1058 = vadd.f32 %v903, %v1001
      %v1059 = vadd.f32 %v905, %v1005
      %v1060 = vadd.f32 %v966, %v1009
      %v1061 = vadd.f32 %v968, %v1013
      %v1062 = vadd.f32 %v781, %v985
      %v1063 = vadd.f32 %v783, %v989
      %v1064 = vadd.f32 %v844, %v993
      %v1065 = vadd.f32 %v846, %v997
      %v1066 = vadd.f32 %v907, %v1001
      %v1067 = vadd.f32 %v909, %v1005
      %v1068 = vadd.f32 %v970, %v1009
      %v1069 = vadd.f32 %v972, %v1013
      %v1070 = vld [vmem:[#allocation3] sm:$0xff]
      %v1071 = vld [vmem:[#allocation3 + $0x8] sm:$0xff]
      %v1072 = vld [vmem:[#allocation3 + $0x10] sm:$0xff]
      %v1073 = vld [vmem:[#allocation3 + $0x18] sm:$0xff]
      %v1074 = vld [vmem:[#allocation3 + $0x20] sm:$0xff]
      %v1075 = vld [vmem:[#allocation3 + $0x28] sm:$0xff]
      %v1076 = vmax.f32 %v1022, %v1023
      %v1077 = vmax.f32 %v1076, %v1024
      %v1078 = vmax.f32 %v1077, %v1025
      %v1079 = vmax.f32 %v1078, %v1026
      %v1080 = vmax.f32 %v1079, %v1027
      %v1081 = vmax.f32 %v1080, %v1028
      %v1082 = vmax.f32 %v1081, %v1029
      %1083 = vmax.xlane.f32.xlu0 %v1082
      %v1084 = vpop.xlane.xlu0 %1083
      %v1085 = vmax.f32 %v1030, %v1031
      %v1086 = vmax.f32 %v1085, %v1032
      %v1087 = vmax.f32 %v1086, %v1033
      %v1088 = vmax.f32 %v1087, %v1034
      %v1089 = vmax.f32 %v1088, %v1035
      %v1090 = vmax.f32 %v1089, %v1036
      %v1091 = vmax.f32 %v1090, %v1037
      %1092 = vmax.xlane.f32.xlu0 %v1091
      %v1093 = vpop.xlane.xlu0 %1092
      %v1094 = vmax.f32 %v1038, %v1039
      %v1095 = vmax.f32 %v1094, %v1040
      %v1096 = vmax.f32 %v1095, %v1041
      %v1097 = vmax.f32 %v1096, %v1042
      %v1098 = vmax.f32 %v1097, %v1043
      %v1099 = vmax.f32 %v1098, %v1044
      %v1100 = vmax.f32 %v1099, %v1045
      %1101 = vmax.xlane.f32.xlu0 %v1100
      %v1102 = vpop.xlane.xlu0 %1101
      %v1103 = vmax.f32 %v1046, %v1047
      %v1104 = vmax.f32 %v1103, %v1048
      %v1105 = vmax.f32 %v1104, %v1049
      %v1106 = vmax.f32 %v1105, %v1050
      %v1107 = vmax.f32 %v1106, %v1051
      %v1108 = vmax.f32 %v1107, %v1052
      %v1109 = vmax.f32 %v1108, %v1053
      %1110 = vmax.xlane.f32.xlu0 %v1109
      %v1111 = vpop.xlane.xlu0 %1110
      %v1112 = vmax.f32 %v1054, %v1055
      %v1113 = vmax.f32 %v1112, %v1056
      %v1114 = vmax.f32 %v1113, %v1057
      %v1115 = vmax.f32 %v1114, %v1058
      %v1116 = vmax.f32 %v1115, %v1059
      %v1117 = vmax.f32 %v1116, %v1060
      %v1118 = vmax.f32 %v1117, %v1061
      %1119 = vmax.xlane.f32.xlu0 %v1118
      %v1120 = vpop.xlane.xlu0 %1119
      %v1121 = vmax.f32 %v1062, %v1063
      %v1122 = vmax.f32 %v1121, %v1064
      %v1123 = vmax.f32 %v1122, %v1065
      %v1124 = vmax.f32 %v1123, %v1066
      %v1125 = vmax.f32 %v1124, %v1067
      %v1126 = vmax.f32 %v1125, %v1068
      %v1127 = vmax.f32 %v1126, %v1069
      %1128 = vmax.xlane.f32.xlu0 %v1127
      %v1129 = vpop.xlane.xlu0 %1128
      %v1130 = vmax.f32 %v1070, %v1084
      %v1131 = vmax.f32 %v1071, %v1093
      %v1132 = vmax.f32 %v1072, %v1102
      %v1133 = vmax.f32 %v1073, %v1111
      %v1134 = vmax.f32 %v1074, %v1120
      %v1135 = vmax.f32 %v1075, %v1129
      %v1136 = vsub.f32 %v1070, %v1130
      %v1137 = vsub.f32 %v1071, %v1131
      %v1138 = vsub.f32 %v1072, %v1132
      %v1139 = vsub.f32 %v1073, %v1133
      %v1140 = vsub.f32 %v1074, %v1134
      %v1141 = vsub.f32 %v1075, %v1135
      %v1142 = vmul.f32 %v1136, 1.442695
      %v1143 = vpow.pop %v1142
      %v1144 = vmul.f32 %v1137, 1.442695
      %v1145 = vpow.pop %v1144
      %v1146 = vmul.f32 %v1138, 1.442695
      %v1147 = vpow.pop %v1146
      %v1148 = vmul.f32 %v1139, 1.442695
      %v1149 = vpow.pop %v1148
      %v1150 = vmul.f32 %v1140, 1.442695
      %v1151 = vpow.pop %v1150
      %v1152 = vmul.f32 %v1141, 1.442695
      %v1153 = vpow.pop %v1152
      %v1154 = vld [vmem:[#allocation4] sm:$0xff]
      %v1155 = vld [vmem:[#allocation4 + $0x8] sm:$0xff]
      %v1156 = vld [vmem:[#allocation4 + $0x10] sm:$0xff]
      %v1157 = vld [vmem:[#allocation4 + $0x18] sm:$0xff]
      %v1158 = vld [vmem:[#allocation4 + $0x20] sm:$0xff]
      %v1159 = vld [vmem:[#allocation4 + $0x28] sm:$0xff]
      %v1160 = vmul.f32 %v1143, %v1154
      %v1161 = vmul.f32 %v1145, %v1155
      %v1162 = vmul.f32 %v1147, %v1156
      %v1163 = vmul.f32 %v1149, %v1157
      %v1164 = vmul.f32 %v1151, %v1158
      %v1165 = vmul.f32 %v1153, %v1159
      %1167 = vset.pattern.permute.xlu0 0
      %1168 = vperm.xlu0 %1167, %v1130
      %v1169 = vpop.permute.xlu0 %1168
      %1172 = vset.pattern.permute.xlu0 0
      %1173 = vperm.xlu0 %1172, %v1131
      %v1174 = vpop.permute.xlu0 %1173
      %1177 = vset.pattern.permute.xlu0 0
      %1178 = vperm.xlu0 %1177, %v1132
      %v1179 = vpop.permute.xlu0 %1178
      %1182 = vset.pattern.permute.xlu0 0
      %1183 = vperm.xlu0 %1182, %v1133
      %v1184 = vpop.permute.xlu0 %1183
      %1187 = vset.pattern.permute.xlu0 0
      %1188 = vperm.xlu0 %1187, %v1134
      %v1189 = vpop.permute.xlu0 %1188
      %1192 = vset.pattern.permute.xlu0 0
      %1193 = vperm.xlu0 %1192, %v1135
      %v1194 = vpop.permute.xlu0 %1193
      %v1196 = vsub.f32 %v1022, %v1169
      %v1197 = vsub.f32 %v1023, %v1169
      %v1198 = vsub.f32 %v1024, %v1169
      %v1199 = vsub.f32 %v1025, %v1169
      %v1200 = vsub.f32 %v1026, %v1169
      %v1201 = vsub.f32 %v1027, %v1169
      %v1202 = vsub.f32 %v1028, %v1169
      %v1203 = vsub.f32 %v1029, %v1169
      %v1204 = vsub.f32 %v1030, %v1174
      %v1205 = vsub.f32 %v1031, %v1174
      %v1206 = vsub.f32 %v1032, %v1174
      %v1207 = vsub.f32 %v1033, %v1174
      %v1208 = vsub.f32 %v1034, %v1174
      %v1209 = vsub.f32 %v1035, %v1174
      %v1210 = vsub.f32 %v1036, %v1174
      %v1211 = vsub.f32 %v1037, %v1174
      %v1212 = vsub.f32 %v1038, %v1179
      %v1213 = vsub.f32 %v1039, %v1179
      %v1214 = vsub.f32 %v1040, %v1179
      %v1215 = vsub.f32 %v1041, %v1179
      %v1216 = vsub.f32 %v1042, %v1179
      %v1217 = vsub.f32 %v1043, %v1179
      %v1218 = vsub.f32 %v1044, %v1179
      %v1219 = vsub.f32 %v1045, %v1179
      %v1220 = vsub.f32 %v1046, %v1184
      %v1221 = vsub.f32 %v1047, %v1184
      %v1222 = vsub.f32 %v1048, %v1184
      %v1223 = vsub.f32 %v1049, %v1184
      %v1224 = vsub.f32 %v1050, %v1184
      %v1225 = vsub.f32 %v1051, %v1184
      %v1226 = vsub.f32 %v1052, %v1184
      %v1227 = vsub.f32 %v1053, %v1184
      %v1228 = vsub.f32 %v1054, %v1189
      %v1229 = vsub.f32 %v1055, %v1189
      %v1230 = vsub.f32 %v1056, %v1189
      %v1231 = vsub.f32 %v1057, %v1189
      %v1232 = vsub.f32 %v1058, %v1189
      %v1233 = vsub.f32 %v1059, %v1189
      %v1234 = vsub.f32 %v1060, %v1189
      %v1235 = vsub.f32 %v1061, %v1189
      %v1236 = vsub.f32 %v1062, %v1194
      %v1237 = vsub.f32 %v1063, %v1194
      %v1238 = vsub.f32 %v1064, %v1194
      %v1239 = vsub.f32 %v1065, %v1194
      %v1240 = vsub.f32 %v1066, %v1194
      %v1241 = vsub.f32 %v1067, %v1194
      %v1242 = vsub.f32 %v1068, %v1194
      %v1243 = vsub.f32 %v1069, %v1194
      %v1244 = vmul.f32 %v1196, 1.442695
      %v1245 = vpow.pop %v1244
      %v1246 = vmul.f32 %v1197, 1.442695
      %v1247 = vpow.pop %v1246
      %v1248 = vmul.f32 %v1198, 1.442695
      %v1249 = vpow.pop %v1248
      %v1250 = vmul.f32 %v1199, 1.442695
      %v1251 = vpow.pop %v1250
      %v1252 = vmul.f32 %v1200, 1.442695
      %v1253 = vpow.pop %v1252
      %v1254 = vmul.f32 %v1201, 1.442695
      %v1255 = vpow.pop %v1254
      %v1256 = vmul.f32 %v1202, 1.442695
      %v1257 = vpow.pop %v1256
      %v1258 = vmul.f32 %v1203, 1.442695
      %v1259 = vpow.pop %v1258
      %v1260 = vmul.f32 %v1204, 1.442695
      %v1261 = vpow.pop %v1260
      %v1262 = vmul.f32 %v1205, 1.442695
      %v1263 = vpow.pop %v1262
      %v1264 = vmul.f32 %v1206, 1.442695
      %v1265 = vpow.pop %v1264
      %v1266 = vmul.f32 %v1207, 1.442695
      %v1267 = vpow.pop %v1266
      %v1268 = vmul.f32 %v1208, 1.442695
      %v1269 = vpow.pop %v1268
      %v1270 = vmul.f32 %v1209, 1.442695
      %v1271 = vpow.pop %v1270
      %v1272 = vmul.f32 %v1210, 1.442695
      %v1273 = vpow.pop %v1272
      %v1274 = vmul.f32 %v1211, 1.442695
      %v1275 = vpow.pop %v1274
      %v1276 = vmul.f32 %v1212, 1.442695
      %v1277 = vpow.pop %v1276
      %v1278 = vmul.f32 %v1213, 1.442695
      %v1279 = vpow.pop %v1278
      %v1280 = vmul.f32 %v1214, 1.442695
      %v1281 = vpow.pop %v1280
      %v1282 = vmul.f32 %v1215, 1.442695
      %v1283 = vpow.pop %v1282
      %v1284 = vmul.f32 %v1216, 1.442695
      %v1285 = vpow.pop %v1284
      %v1286 = vmul.f32 %v1217, 1.442695
      %v1287 = vpow.pop %v1286
      %v1288 = vmul.f32 %v1218, 1.442695
      %v1289 = vpow.pop %v1288
      %v1290 = vmul.f32 %v1219, 1.442695
      %v1291 = vpow.pop %v1290
      %v1292 = vmul.f32 %v1220, 1.442695
      %v1293 = vpow.pop %v1292
      %v1294 = vmul.f32 %v1221, 1.442695
      %v1295 = vpow.pop %v1294
      %v1296 = vmul.f32 %v1222, 1.442695
      %v1297 = vpow.pop %v1296
      %v1298 = vmul.f32 %v1223, 1.442695
      %v1299 = vpow.pop %v1298
      %v1300 = vmul.f32 %v1224, 1.442695
      %v1301 = vpow.pop %v1300
      %v1302 = vmul.f32 %v1225, 1.442695
      %v1303 = vpow.pop %v1302
      %v1304 = vmul.f32 %v1226, 1.442695
      %v1305 = vpow.pop %v1304
      %v1306 = vmul.f32 %v1227, 1.442695
      %v1307 = vpow.pop %v1306
      %v1308 = vmul.f32 %v1228, 1.442695
      %v1309 = vpow.pop %v1308
      %v1310 = vmul.f32 %v1229, 1.442695
      %v1311 = vpow.pop %v1310
      %v1312 = vmul.f32 %v1230, 1.442695
      %v1313 = vpow.pop %v1312
      %v1314 = vmul.f32 %v1231, 1.442695
      %v1315 = vpow.pop %v1314
      %v1316 = vmul.f32 %v1232, 1.442695
      %v1317 = vpow.pop %v1316
      %v1318 = vmul.f32 %v1233, 1.442695
      %v1319 = vpow.pop %v1318
      %v1320 = vmul.f32 %v1234, 1.442695
      %v1321 = vpow.pop %v1320
      %v1322 = vmul.f32 %v1235, 1.442695
      %v1323 = vpow.pop %v1322
      %v1324 = vmul.f32 %v1236, 1.442695
      %v1325 = vpow.pop %v1324
      %v1326 = vmul.f32 %v1237, 1.442695
      %v1327 = vpow.pop %v1326
      %v1328 = vmul.f32 %v1238, 1.442695
      %v1329 = vpow.pop %v1328
      %v1330 = vmul.f32 %v1239, 1.442695
      %v1331 = vpow.pop %v1330
      %v1332 = vmul.f32 %v1240, 1.442695
      %v1333 = vpow.pop %v1332
      %v1334 = vmul.f32 %v1241, 1.442695
      %v1335 = vpow.pop %v1334
      %v1336 = vmul.f32 %v1242, 1.442695
      %v1337 = vpow.pop %v1336
      %v1338 = vmul.f32 %v1243, 1.442695
      %v1339 = vpow.pop %v1338
      %v1340 = vadd.f32 %v1245, %v1247
      %v1341 = vadd.f32 %v1340, %v1249
      %v1342 = vadd.f32 %v1341, %v1251
      %v1343 = vadd.f32 %v1342, %v1253
      %v1344 = vadd.f32 %v1343, %v1255
      %v1345 = vadd.f32 %v1344, %v1257
      %v1346 = vadd.f32 %v1345, %v1259
      %1347 = vadd.xlane.f32.xlu0 %v1346
      %v1348 = vpop.xlane.xlu0 %1347
      %v1349 = vadd.f32 %v1261, %v1263
      %v1350 = vadd.f32 %v1349, %v1265
      %v1351 = vadd.f32 %v1350, %v1267
      %v1352 = vadd.f32 %v1351, %v1269
      %v1353 = vadd.f32 %v1352, %v1271
      %v1354 = vadd.f32 %v1353, %v1273
      %v1355 = vadd.f32 %v1354, %v1275
      %1356 = vadd.xlane.f32.xlu0 %v1355
      %v1357 = vpop.xlane.xlu0 %1356
      %v1358 = vadd.f32 %v1277, %v1279
      %v1359 = vadd.f32 %v1358, %v1281
      %v1360 = vadd.f32 %v1359, %v1283
      %v1361 = vadd.f32 %v1360, %v1285
      %v1362 = vadd.f32 %v1361, %v1287
      %v1363 = vadd.f32 %v1362, %v1289
      %v1364 = vadd.f32 %v1363, %v1291
      %1365 = vadd.xlane.f32.xlu0 %v1364
      %v1366 = vpop.xlane.xlu0 %1365
      %v1367 = vadd.f32 %v1293, %v1295
      %v1368 = vadd.f32 %v1367, %v1297
      %v1369 = vadd.f32 %v1368, %v1299
      %v1370 = vadd.f32 %v1369, %v1301
      %v1371 = vadd.f32 %v1370, %v1303
      %v1372 = vadd.f32 %v1371, %v1305
      %v1373 = vadd.f32 %v1372, %v1307
      %1374 = vadd.xlane.f32.xlu0 %v1373
      %v1375 = vpop.xlane.xlu0 %1374
      %v1376 = vadd.f32 %v1309, %v1311
      %v1377 = vadd.f32 %v1376, %v1313
      %v1378 = vadd.f32 %v1377, %v1315
      %v1379 = vadd.f32 %v1378, %v1317
      %v1380 = vadd.f32 %v1379, %v1319
      %v1381 = vadd.f32 %v1380, %v1321
      %v1382 = vadd.f32 %v1381, %v1323
      %1383 = vadd.xlane.f32.xlu0 %v1382
      %v1384 = vpop.xlane.xlu0 %1383
      %v1385 = vadd.f32 %v1325, %v1327
      %v1386 = vadd.f32 %v1385, %v1329
      %v1387 = vadd.f32 %v1386, %v1331
      %v1388 = vadd.f32 %v1387, %v1333
      %v1389 = vadd.f32 %v1388, %v1335
      %v1390 = vadd.f32 %v1389, %v1337
      %v1391 = vadd.f32 %v1390, %v1339
      %1392 = vadd.xlane.f32.xlu0 %v1391
      %v1393 = vpop.xlane.xlu0 %1392
      %v1394 = vadd.f32 %v1160, %v1348
      %v1395 = vadd.f32 %v1161, %v1357
      %v1396 = vadd.f32 %v1162, %v1366
      %v1397 = vadd.f32 %v1163, %v1375
      %v1398 = vadd.f32 %v1164, %v1384
      %v1399 = vadd.f32 %v1165, %v1393
      %vm1400 = vcmask 7168
      %1401 = vst.msk [vmem:[#allocation4] sm:$0xff] %vm1400, %v1394
      %1402 = vst.msk [vmem:[#allocation4 + $0x8] sm:$0xff] %vm1400, %v1395
      %1403 = vst.msk [vmem:[#allocation4 + $0x10] sm:$0xff] %vm1400, %v1396
      %1404 = vst.msk [vmem:[#allocation4 + $0x18] sm:$0xff] %vm1400, %v1397
      %1405 = vst.msk [vmem:[#allocation4 + $0x20] sm:$0xff] %vm1400, %v1398
      %1406 = vst.msk [vmem:[#allocation4 + $0x28] sm:$0xff] %vm1400, %v1399
      %1407 = vst.msk [vmem:[#allocation3] sm:$0xff] %vm1400, %v1130
      %1408 = vst.msk [vmem:[#allocation3 + $0x8] sm:$0xff] %vm1400, %v1131
      %1409 = vst.msk [vmem:[#allocation3 + $0x10] sm:$0xff] %vm1400, %v1132
      %1410 = vst.msk [vmem:[#allocation3 + $0x18] sm:$0xff] %vm1400, %v1133
      %1411 = vst.msk [vmem:[#allocation3 + $0x20] sm:$0xff] %vm1400, %v1134
      %1412 = vst.msk [vmem:[#allocation3 + $0x28] sm:$0xff] %vm1400, %v1135
    $region49: #{tpu_custom_call.1} parent=1 // pred_fallthru
      _
    %p1413 = scmp.le.s32.totalorder %s975, 512
    // Predicated region
    $region50: #{tpu_custom_call.1} parent=1 // pred_check
      %p1414 = pneg %p1413
    $region51: #{tpu_custom_call.1} parent=1 // pred_check_branch
      %1416 = sbr.rel (%p1414) target = $region53
    $region52: #{tpu_custom_call.1} parent=1 // pred_region
      %v1417 = vld [vmem:[#allocation3] sm:$0xff]
      %v1418 = vld [vmem:[#allocation3 + $0x8] sm:$0xff]
      %v1419 = vld [vmem:[#allocation3 + $0x10] sm:$0xff]
      %v1420 = vld [vmem:[#allocation3 + $0x18] sm:$0xff]
      %v1421 = vld [vmem:[#allocation3 + $0x20] sm:$0xff]
      %v1422 = vld [vmem:[#allocation3 + $0x28] sm:$0xff]
      %v1423 = vmax.f32 %v757, %v759
      %v1424 = vmax.f32 %v1423, %v820
      %v1425 = vmax.f32 %v1424, %v822
      %v1426 = vmax.f32 %v1425, %v883
      %v1427 = vmax.f32 %v1426, %v885
      %v1428 = vmax.f32 %v1427, %v946
      %v1429 = vmax.f32 %v1428, %v948
      %1430 = vmax.xlane.f32.xlu0 %v1429
      %v1431 = vpop.xlane.xlu0 %1430
      %v1432 = vmax.f32 %v761, %v763
      %v1433 = vmax.f32 %v1432, %v824
      %v1434 = vmax.f32 %v1433, %v826
      %v1435 = vmax.f32 %v1434, %v887
      %v1436 = vmax.f32 %v1435, %v889
      %v1437 = vmax.f32 %v1436, %v950
      %v1438 = vmax.f32 %v1437, %v952
      %1439 = vmax.xlane.f32.xlu0 %v1438
      %v1440 = vpop.xlane.xlu0 %1439
      %v1441 = vmax.f32 %v767, %v769
      %v1442 = vmax.f32 %v1441, %v830
      %v1443 = vmax.f32 %v1442, %v832
      %v1444 = vmax.f32 %v1443, %v893
      %v1445 = vmax.f32 %v1444, %v895
      %v1446 = vmax.f32 %v1445, %v956
      %v1447 = vmax.f32 %v1446, %v958
      %1448 = vmax.xlane.f32.xlu0 %v1447
      %v1449 = vpop.xlane.xlu0 %1448
      %v1450 = vmax.f32 %v771, %v773
      %v1451 = vmax.f32 %v1450, %v834
      %v1452 = vmax.f32 %v1451, %v836
      %v1453 = vmax.f32 %v1452, %v897
      %v1454 = vmax.f32 %v1453, %v899
      %v1455 = vmax.f32 %v1454, %v960
      %v1456 = vmax.f32 %v1455, %v962
      %1457 = vmax.xlane.f32.xlu0 %v1456
      %v1458 = vpop.xlane.xlu0 %1457
      %v1459 = vmax.f32 %v777, %v779
      %v1460 = vmax.f32 %v1459, %v840
      %v1461 = vmax.f32 %v1460, %v842
      %v1462 = vmax.f32 %v1461, %v903
      %v1463 = vmax.f32 %v1462, %v905
      %v1464 = vmax.f32 %v1463, %v966
      %v1465 = vmax.f32 %v1464, %v968
      %1466 = vmax.xlane.f32.xlu0 %v1465
      %v1467 = vpop.xlane.xlu0 %1466
      %v1468 = vmax.f32 %v781, %v783
      %v1469 = vmax.f32 %v1468, %v844
      %v1470 = vmax.f32 %v1469, %v846
      %v1471 = vmax.f32 %v1470, %v907
      %v1472 = vmax.f32 %v1471, %v909
      %v1473 = vmax.f32 %v1472, %v970
      %v1474 = vmax.f32 %v1473, %v972
      %1475 = vmax.xlane.f32.xlu0 %v1474
      %v1476 = vpop.xlane.xlu0 %1475
      %v1477 = vmax.f32 %v1417, %v1431
      %v1478 = vmax.f32 %v1418, %v1440
      %v1479 = vmax.f32 %v1419, %v1449
      %v1480 = vmax.f32 %v1420, %v1458
      %v1481 = vmax.f32 %v1421, %v1467
      %v1482 = vmax.f32 %v1422, %v1476
      %v1483 = vsub.f32 %v1417, %v1477
      %v1484 = vsub.f32 %v1418, %v1478
      %v1485 = vsub.f32 %v1419, %v1479
      %v1486 = vsub.f32 %v1420, %v1480
      %v1487 = vsub.f32 %v1421, %v1481
      %v1488 = vsub.f32 %v1422, %v1482
      %v1489 = vmul.f32 %v1483, 1.442695
      %v1490 = vpow.pop %v1489
      %v1491 = vmul.f32 %v1484, 1.442695
      %v1492 = vpow.pop %v1491
      %v1493 = vmul.f32 %v1485, 1.442695
      %v1494 = vpow.pop %v1493
      %v1495 = vmul.f32 %v1486, 1.442695
      %v1496 = vpow.pop %v1495
      %v1497 = vmul.f32 %v1487, 1.442695
      %v1498 = vpow.pop %v1497
      %v1499 = vmul.f32 %v1488, 1.442695
      %v1500 = vpow.pop %v1499
      %v1501 = vld [vmem:[#allocation4] sm:$0xff]
      %v1502 = vld [vmem:[#allocation4 + $0x8] sm:$0xff]
      %v1503 = vld [vmem:[#allocation4 + $0x10] sm:$0xff]
      %v1504 = vld [vmem:[#allocation4 + $0x18] sm:$0xff]
      %v1505 = vld [vmem:[#allocation4 + $0x20] sm:$0xff]
      %v1506 = vld [vmem:[#allocation4 + $0x28] sm:$0xff]
      %v1507 = vmul.f32 %v1490, %v1501
      %v1508 = vmul.f32 %v1492, %v1502
      %v1509 = vmul.f32 %v1494, %v1503
      %v1510 = vmul.f32 %v1496, %v1504
      %v1511 = vmul.f32 %v1498, %v1505
      %v1512 = vmul.f32 %v1500, %v1506
      %1514 = vset.pattern.permute.xlu0 0
      %1515 = vperm.xlu0 %1514, %v1477
      %v1516 = vpop.permute.xlu0 %1515
      %1519 = vset.pattern.permute.xlu0 0
      %1520 = vperm.xlu0 %1519, %v1478
      %v1521 = vpop.permute.xlu0 %1520
      %1524 = vset.pattern.permute.xlu0 0
      %1525 = vperm.xlu0 %1524, %v1479
      %v1526 = vpop.permute.xlu0 %1525
      %1529 = vset.pattern.permute.xlu0 0
      %1530 = vperm.xlu0 %1529, %v1480
      %v1531 = vpop.permute.xlu0 %1530
      %1534 = vset.pattern.permute.xlu0 0
      %1535 = vperm.xlu0 %1534, %v1481
      %v1536 = vpop.permute.xlu0 %1535
      %1539 = vset.pattern.permute.xlu0 0
      %1540 = vperm.xlu0 %1539, %v1482
      %v1541 = vpop.permute.xlu0 %1540
      %v1543 = vsub.f32 %v757, %v1516
      %v1544 = vsub.f32 %v759, %v1516
      %v1545 = vsub.f32 %v820, %v1516
      %v1546 = vsub.f32 %v822, %v1516
      %v1547 = vsub.f32 %v883, %v1516
      %v1548 = vsub.f32 %v885, %v1516
      %v1549 = vsub.f32 %v946, %v1516
      %v1550 = vsub.f32 %v948, %v1516
      %v1551 = vsub.f32 %v761, %v1521
      %v1552 = vsub.f32 %v763, %v1521
      %v1553 = vsub.f32 %v824, %v1521
      %v1554 = vsub.f32 %v826, %v1521
      %v1555 = vsub.f32 %v887, %v1521
      %v1556 = vsub.f32 %v889, %v1521
      %v1557 = vsub.f32 %v950, %v1521
      %v1558 = vsub.f32 %v952, %v1521
      %v1559 = vsub.f32 %v767, %v1526
      %v1560 = vsub.f32 %v769, %v1526
      %v1561 = vsub.f32 %v830, %v1526
      %v1562 = vsub.f32 %v832, %v1526
      %v1563 = vsub.f32 %v893, %v1526
      %v1564 = vsub.f32 %v895, %v1526
      %v1565 = vsub.f32 %v956, %v1526
      %v1566 = vsub.f32 %v958, %v1526
      %v1567 = vsub.f32 %v771, %v1531
      %v1568 = vsub.f32 %v773, %v1531
      %v1569 = vsub.f32 %v834, %v1531
      %v1570 = vsub.f32 %v836, %v1531
      %v1571 = vsub.f32 %v897, %v1531
      %v1572 = vsub.f32 %v899, %v1531
      %v1573 = vsub.f32 %v960, %v1531
      %v1574 = vsub.f32 %v962, %v1531
      %v1575 = vsub.f32 %v777, %v1536
      %v1576 = vsub.f32 %v779, %v1536
      %v1577 = vsub.f32 %v840, %v1536
      %v1578 = vsub.f32 %v842, %v1536
      %v1579 = vsub.f32 %v903, %v1536
      %v1580 = vsub.f32 %v905, %v1536
      %v1581 = vsub.f32 %v966, %v1536
      %v1582 = vsub.f32 %v968, %v1536
      %v1583 = vsub.f32 %v781, %v1541
      %v1584 = vsub.f32 %v783, %v1541
      %v1585 = vsub.f32 %v844, %v1541
      %v1586 = vsub.f32 %v846, %v1541
      %v1587 = vsub.f32 %v907, %v1541
      %v1588 = vsub.f32 %v909, %v1541
      %v1589 = vsub.f32 %v970, %v1541
      %v1590 = vsub.f32 %v972, %v1541
      %v1591 = vmul.f32 %v1543, 1.442695
      %v1592 = vpow.pop %v1591
      %v1593 = vmul.f32 %v1544, 1.442695
      %v1594 = vpow.pop %v1593
      %v1595 = vmul.f32 %v1545, 1.442695
      %v1596 = vpow.pop %v1595
      %v1597 = vmul.f32 %v1546, 1.442695
      %v1598 = vpow.pop %v1597
      %v1599 = vmul.f32 %v1547, 1.442695
      %v1600 = vpow.pop %v1599
      %v1601 = vmul.f32 %v1548, 1.442695
      %v1602 = vpow.pop %v1601
      %v1603 = vmul.f32 %v1549, 1.442695
      %v1604 = vpow.pop %v1603
      %v1605 = vmul.f32 %v1550, 1.442695
      %v1606 = vpow.pop %v1605
      %v1607 = vmul.f32 %v1551, 1.442695
      %v1608 = vpow.pop %v1607
      %v1609 = vmul.f32 %v1552, 1.442695
      %v1610 = vpow.pop %v1609
      %v1611 = vmul.f32 %v1553, 1.442695
      %v1612 = vpow.pop %v1611
      %v1613 = vmul.f32 %v1554, 1.442695
      %v1614 = vpow.pop %v1613
      %v1615 = vmul.f32 %v1555, 1.442695
      %v1616 = vpow.pop %v1615
      %v1617 = vmul.f32 %v1556, 1.442695
      %v1618 = vpow.pop %v1617
      %v1619 = vmul.f32 %v1557, 1.442695
      %v1620 = vpow.pop %v1619
      %v1621 = vmul.f32 %v1558, 1.442695
      %v1622 = vpow.pop %v1621
      %v1623 = vmul.f32 %v1559, 1.442695
      %v1624 = vpow.pop %v1623
      %v1625 = vmul.f32 %v1560, 1.442695
      %v1626 = vpow.pop %v1625
      %v1627 = vmul.f32 %v1561, 1.442695
      %v1628 = vpow.pop %v1627
      %v1629 = vmul.f32 %v1562, 1.442695
      %v1630 = vpow.pop %v1629
      %v1631 = vmul.f32 %v1563, 1.442695
      %v1632 = vpow.pop %v1631
      %v1633 = vmul.f32 %v1564, 1.442695
      %v1634 = vpow.pop %v1633
      %v1635 = vmul.f32 %v1565, 1.442695
      %v1636 = vpow.pop %v1635
      %v1637 = vmul.f32 %v1566, 1.442695
      %v1638 = vpow.pop %v1637
      %v1639 = vmul.f32 %v1567, 1.442695
      %v1640 = vpow.pop %v1639
      %v1641 = vmul.f32 %v1568, 1.442695
      %v1642 = vpow.pop %v1641
      %v1643 = vmul.f32 %v1569, 1.442695
      %v1644 = vpow.pop %v1643
      %v1645 = vmul.f32 %v1570, 1.442695
      %v1646 = vpow.pop %v1645
      %v1647 = vmul.f32 %v1571, 1.442695
      %v1648 = vpow.pop %v1647
      %v1649 = vmul.f32 %v1572, 1.442695
      %v1650 = vpow.pop %v1649
      %v1651 = vmul.f32 %v1573, 1.442695
      %v1652 = vpow.pop %v1651
      %v1653 = vmul.f32 %v1574, 1.442695
      %v1654 = vpow.pop %v1653
      %v1655 = vmul.f32 %v1575, 1.442695
      %v1656 = vpow.pop %v1655
      %v1657 = vmul.f32 %v1576, 1.442695
      %v1658 = vpow.pop %v1657
      %v1659 = vmul.f32 %v1577, 1.442695
      %v1660 = vpow.pop %v1659
      %v1661 = vmul.f32 %v1578, 1.442695
      %v1662 = vpow.pop %v1661
      %v1663 = vmul.f32 %v1579, 1.442695
      %v1664 = vpow.pop %v1663
      %v1665 = vmul.f32 %v1580, 1.442695
      %v1666 = vpow.pop %v1665
      %v1667 = vmul.f32 %v1581, 1.442695
      %v1668 = vpow.pop %v1667
      %v1669 = vmul.f32 %v1582, 1.442695
      %v1670 = vpow.pop %v1669
      %v1671 = vmul.f32 %v1583, 1.442695
      %v1672 = vpow.pop %v1671
      %v1673 = vmul.f32 %v1584, 1.442695
      %v1674 = vpow.pop %v1673
      %v1675 = vmul.f32 %v1585, 1.442695
      %v1676 = vpow.pop %v1675
      %v1677 = vmul.f32 %v1586, 1.442695
      %v1678 = vpow.pop %v1677
      %v1679 = vmul.f32 %v1587, 1.442695
      %v1680 = vpow.pop %v1679
      %v1681 = vmul.f32 %v1588, 1.442695
      %v1682 = vpow.pop %v1681
      %v1683 = vmul.f32 %v1589, 1.442695
      %v1684 = vpow.pop %v1683
      %v1685 = vmul.f32 %v1590, 1.442695
      %v1686 = vpow.pop %v1685
      %v1687 = vadd.f32 %v1592, %v1594
      %v1688 = vadd.f32 %v1687, %v1596
      %v1689 = vadd.f32 %v1688, %v1598
      %v1690 = vadd.f32 %v1689, %v1600
      %v1691 = vadd.f32 %v1690, %v1602
      %v1692 = vadd.f32 %v1691, %v1604
      %v1693 = vadd.f32 %v1692, %v1606
      %1694 = vadd.xlane.f32.xlu0 %v1693
      %v1695 = vpop.xlane.xlu0 %1694
      %v1696 = vadd.f32 %v1608, %v1610
      %v1697 = vadd.f32 %v1696, %v1612
      %v1698 = vadd.f32 %v1697, %v1614
      %v1699 = vadd.f32 %v1698, %v1616
      %v1700 = vadd.f32 %v1699, %v1618
      %v1701 = vadd.f32 %v1700, %v1620
      %v1702 = vadd.f32 %v1701, %v1622
      %1703 = vadd.xlane.f32.xlu0 %v1702
      %v1704 = vpop.xlane.xlu0 %1703
      %v1705 = vadd.f32 %v1624, %v1626
      %v1706 = vadd.f32 %v1705, %v1628
      %v1707 = vadd.f32 %v1706, %v1630
      %v1708 = vadd.f32 %v1707, %v1632
      %v1709 = vadd.f32 %v1708, %v1634
      %v1710 = vadd.f32 %v1709, %v1636
      %v1711 = vadd.f32 %v1710, %v1638
      %1712 = vadd.xlane.f32.xlu0 %v1711
      %v1713 = vpop.xlane.xlu0 %1712
      %v1714 = vadd.f32 %v1640, %v1642
      %v1715 = vadd.f32 %v1714, %v1644
      %v1716 = vadd.f32 %v1715, %v1646
      %v1717 = vadd.f32 %v1716, %v1648
      %v1718 = vadd.f32 %v1717, %v1650
      %v1719 = vadd.f32 %v1718, %v1652
      %v1720 = vadd.f32 %v1719, %v1654
      %1721 = vadd.xlane.f32.xlu0 %v1720
      %v1722 = vpop.xlane.xlu0 %1721
      %v1723 = vadd.f32 %v1656, %v1658
      %v1724 = vadd.f32 %v1723, %v1660
      %v1725 = vadd.f32 %v1724, %v1662
      %v1726 = vadd.f32 %v1725, %v1664
      %v1727 = vadd.f32 %v1726, %v1666
      %v1728 = vadd.f32 %v1727, %v1668
      %v1729 = vadd.f32 %v1728, %v1670
      %1730 = vadd.xlane.f32.xlu0 %v1729
      %v1731 = vpop.xlane.xlu0 %1730
      %v1732 = vadd.f32 %v1672, %v1674
      %v1733 = vadd.f32 %v1732, %v1676
      %v1734 = vadd.f32 %v1733, %v1678
      %v1735 = vadd.f32 %v1734, %v1680
      %v1736 = vadd.f32 %v1735, %v1682
      %v1737 = vadd.f32 %v1736, %v1684
      %v1738 = vadd.f32 %v1737, %v1686
      %1739 = vadd.xlane.f32.xlu0 %v1738
      %v1740 = vpop.xlane.xlu0 %1739
      %v1741 = vadd.f32 %v1507, %v1695
      %v1742 = vadd.f32 %v1508, %v1704
      %v1743 = vadd.f32 %v1509, %v1713
      %v1744 = vadd.f32 %v1510, %v1722
      %v1745 = vadd.f32 %v1511, %v1731
      %v1746 = vadd.f32 %v1512, %v1740
      %vm1747 = vcmask 7168
      %1748 = vst.msk [vmem:[#allocation4] sm:$0xff] %vm1747, %v1741
      %1749 = vst.msk [vmem:[#allocation4 + $0x8] sm:$0xff] %vm1747, %v1742
      %1750 = vst.msk [vmem:[#allocation4 + $0x10] sm:$0xff] %vm1747, %v1743
      %1751 = vst.msk [vmem:[#allocation4 + $0x18] sm:$0xff] %vm1747, %v1744
      %1752 = vst.msk [vmem:[#allocation4 + $0x20] sm:$0xff] %vm1747, %v1745
      %1753 = vst.msk [vmem:[#allocation4 + $0x28] sm:$0xff] %vm1747, %v1746
      %1754 = vst.msk [vmem:[#allocation3] sm:$0xff] %vm1747, %v1477
      %1755 = vst.msk [vmem:[#allocation3 + $0x8] sm:$0xff] %vm1747, %v1478
      %1756 = vst.msk [vmem:[#allocation3 + $0x10] sm:$0xff] %vm1747, %v1479
      %1757 = vst.msk [vmem:[#allocation3 + $0x18] sm:$0xff] %vm1747, %v1480
      %1758 = vst.msk [vmem:[#allocation3 + $0x20] sm:$0xff] %vm1747, %v1481
      %1759 = vst.msk [vmem:[#allocation3 + $0x28] sm:$0xff] %vm1747, %v1482
    $region53: #{tpu_custom_call.1} parent=1 // pred_fallthru
      _
    // Predicated region
    $region54: #{tpu_custom_call.1} parent=1 // pred_check
      %p1760 = pneg %p67
    $region55: #{tpu_custom_call.1} parent=1 // pred_check_branch
      %1762 = sbr.rel (%p1760) target = $region57
    $region56: #{tpu_custom_call.1} parent=1 // pred_region
      %v1763 = vld [vmem:[#allocation3] sm:$0xff]
      %v1764 = vld [vmem:[#allocation3 + $0x8] sm:$0xff]
      %v1765 = vld [vmem:[#allocation3 + $0x10] sm:$0xff]
      %v1766 = vld [vmem:[#allocation3 + $0x18] sm:$0xff]
      %v1767 = vld [vmem:[#allocation3 + $0x20] sm:$0xff]
      %v1768 = vld [vmem:[#allocation3 + $0x28] sm:$0xff]
      %v1769 = vld [vmem:[#allocation4] sm:$0xff]
      %v1770 = vld [vmem:[#allocation4 + $0x8] sm:$0xff]
      %v1771 = vld [vmem:[#allocation4 + $0x10] sm:$0xff]
      %v1772 = vld [vmem:[#allocation4 + $0x18] sm:$0xff]
      %v1773 = vld [vmem:[#allocation4 + $0x20] sm:$0xff]
      %v1774 = vld [vmem:[#allocation4 + $0x28] sm:$0xff]
      %v1775 = vlog2.pop %v1769
      %v1776 = vmul.f32 %v1775, 0.6931472
      %v1777 = vlog2.pop %v1770
      %v1778 = vmul.f32 %v1777, 0.6931472
      %v1779 = vlog2.pop %v1771
      %v1780 = vmul.f32 %v1779, 0.6931472
      %v1781 = vlog2.pop %v1772
      %v1782 = vmul.f32 %v1781, 0.6931472
      %v1783 = vlog2.pop %v1773
      %v1784 = vmul.f32 %v1783, 0.6931472
      %v1785 = vlog2.pop %v1774
      %v1786 = vmul.f32 %v1785, 0.6931472
      %v1787 = vadd.f32 %v1763, %v1776
      %v1788 = vadd.f32 %v1764, %v1778
      %v1789 = vadd.f32 %v1765, %v1780
      %v1790 = vadd.f32 %v1766, %v1782
      %v1791 = vadd.f32 %v1767, %v1784
      %v1792 = vadd.f32 %v1768, %v1786
      %v1793 = vld [vmem:[%s6] sm:$0xff]
      %v1794 = vld [vmem:[%s6 + $0x8] sm:$0xff]
      %v1795 = vld [vmem:[%s6 + $0x10] sm:$0xff]
      %v1796 = vld [vmem:[%s6 + $0x18] sm:$0xff]
      %v1797 = vld [vmem:[%s6 + $0x20] sm:$0xff]
      %v1798 = vld [vmem:[%s6 + $0x28] sm:$0xff]
      %vm1799 = vcmp.ne.s32.totalorder %v1793, 0
      %vm1800 = vcmp.ne.s32.totalorder %v1794, 0
      %vm1801 = vcmp.ne.s32.totalorder %v1795, 0
      %vm1802 = vcmp.ne.s32.totalorder %v1796, 0
      %vm1803 = vcmp.ne.s32.totalorder %v1797, 0
      %vm1804 = vcmp.ne.s32.totalorder %v1798, 0
      %v1805 = vsel %vm1799, 1, 0
      %v1806 = vsel %vm1800, 1, 0
      %v1807 = vsel %vm1801, 1, 0
      %v1808 = vsel %vm1802, 1, 0
      %v1809 = vsel %vm1803, 1, 0
      %v1810 = vsel %vm1804, 1, 0
      %v1811 = vcvt.s32.f32 %v1805
      %v1812 = vcvt.s32.f32 %v1806
      %v1813 = vcvt.s32.f32 %v1807
      %v1814 = vcvt.s32.f32 %v1808
      %v1815 = vcvt.s32.f32 %v1809
      %v1816 = vcvt.s32.f32 %v1810
      %v1817 = vld [vmem:[#allocation5] sm:$0xff]
      %v1818 = vld [vmem:[#allocation5 + $0x8] sm:$0xff]
      %v1819 = vld [vmem:[#allocation5 + $0x10] sm:$0xff]
      %v1820 = vld [vmem:[#allocation5 + $0x18] sm:$0xff]
      %v1821 = vld [vmem:[#allocation5 + $0x20] sm:$0xff]
      %v1822 = vld [vmem:[#allocation5 + $0x28] sm:$0xff]
      %v1823 = vsub.f32 %v1787, %v1817
      %v1824 = vsub.f32 %v1788, %v1818
      %v1825 = vsub.f32 %v1789, %v1819
      %v1826 = vsub.f32 %v1790, %v1820
      %v1827 = vsub.f32 %v1791, %v1821
      %v1828 = vsub.f32 %v1792, %v1822
      %v1829 = vmul.f32 %v1823, %v1811
      %v1830 = vmul.f32 %v1824, %v1812
      %v1831 = vmul.f32 %v1825, %v1813
      %v1832 = vmul.f32 %v1826, %v1814
      %v1833 = vmul.f32 %v1827, %v1815
      %v1834 = vmul.f32 %v1828, %v1816
      %1836 = vset.pattern.permute.xlu0 0
      %1837 = vperm.xlu0 %1836, %v1829
      %v1838 = vpop.permute.xlu0 %1837
      %1841 = vset.pattern.permute.xlu0 0
      %1842 = vperm.xlu0 %1841, %v1830
      %v1843 = vpop.permute.xlu0 %1842
      %1846 = vset.pattern.permute.xlu0 0
      %1847 = vperm.xlu0 %1846, %v1831
      %v1848 = vpop.permute.xlu0 %1847
      %1851 = vset.pattern.permute.xlu0 0
      %1852 = vperm.xlu0 %1851, %v1832
      %v1853 = vpop.permute.xlu0 %1852
      %1856 = vset.pattern.permute.xlu0 0
      %1857 = vperm.xlu0 %1856, %v1833
      %v1858 = vpop.permute.xlu0 %1857
      %1861 = vset.pattern.permute.xlu0 0
      %1862 = vperm.xlu0 %1861, %v1834
      %v1863 = vpop.permute.xlu0 %1862
      %1865 = vst [vmem:[#allocation12] sm:$0xff] %v1838
      %1866 = vst [vmem:[#allocation12 + $0x8] sm:$0xff] %v1843
      %1867 = vst [vmem:[#allocation12 + $0x10] sm:$0xff] %v1848
      %1868 = vst [vmem:[#allocation12 + $0x18] sm:$0xff] %v1853
      %1869 = vst [vmem:[#allocation12 + $0x20] sm:$0xff] %v1858
      %1870 = vst [vmem:[#allocation12 + $0x28] sm:$0xff] %v1863
    $region57: #{tpu_custom_call.1} parent=1 // pred_fallthru
      _
    // Predicated region
    $region58: #{tpu_custom_call.1} parent=1 // pred_check
      _
    $region59: #{tpu_custom_call.1} parent=1 // pred_check_branch
      %1872 = sbr.rel (0) target = $region61
    $region60: #{tpu_custom_call.1} parent=1 // pred_region
      %s1874 = ssub.s32 768, 768
      %1875 = vsyncadd [#allocation8], %s1874
      %s1876 = sshll.u32 [#allocation12], 4
      %s1877 = int_to_ptr.vmem [resolvable:$true] %s1876
      %1882 = dma.vmem_to_hbm [thread:$0]  %s1877, 768, %s7, [#allocation8], 128, 128, 8
    $region61: #{tpu_custom_call.1} parent=1 // pred_fallthru
      _
    // Predicated region
    $region62: #{tpu_custom_call.1} parent=1 // pred_check
      _
    $region63: #{tpu_custom_call.1} parent=1 // pred_check_branch
      %1884 = sbr.rel (0) target = $region65
    $region64: #{tpu_custom_call.1} parent=1 // pred_region
      %1885 = dma.done [#allocation8], 768
    $region65: #{tpu_custom_call.1} parent=1 // pred_fallthru
      _
    %1886 = vsyncpa [#allocation7], 1
    %1887 = vsyncpa [#allocation10], 1
    %1888 = vsyncpa [#allocation8], 1

</llo_original>
